<compile_context>
chip_gen: v7x
topology: tpu7x:2x2x1
jax: 0.10.0
libtpu: 0.0.40
codegen_flags: <defaults>
</compile_context>

<pallas_src>
import functools

import jax
import jax.numpy as jnp
from jax.experimental import pallas as pl
from jax.experimental.pallas import tpu as pltpu


_OUT_VMEM_BUDGET = 8 * 1024 * 1024     # double-buffered output block budget
_TABLE_VMEM_BUDGET = 8 * 1024 * 1024   # 2x table (both pipeline buffers) budget
_MAX_SMEM_IDS = 32 * 1024              # int32 ids per pallas_call (SMEM safety)


def _round_up(x: int, m: int) -> int:
    return ((x + m - 1) // m) * m


def _embed_gather_kernel(ids_ref, table_ref, out_ref, sem, *, tok_blk: int):
    """Gather `tok_blk` embedding rows into the (tok_blk, d_model) out block.

    ids_ref:   (num_tokens_padded,) int32 SMEM scalar-prefetch ref.
    table_ref: (d_vocab, d_model) ref; HBM (pl.ANY) or resident VMEM block.
    out_ref:   (tok_blk, d_model) VMEM output block (sublane/lane dense).
    sem:       one DMA semaphore shared by all row copies of this block.

    Invariant: exactly tok_blk copies of (1, d_model) are issued per block, so
    one wait sized to the whole out_ref block drains the semaphore exactly
    (DMA semaphores count bytes).
    """
    base = pl.program_id(0) * tok_blk

    def issue(t):
        row = ids_ref[base + t]
        pltpu.make_async_copy(
            table_ref.at[pl.ds(row, 1), :],
            out_ref.at[pl.ds(t, 1), :],
            sem,
        ).start()

    if tok_blk <= 64:
        # Full unroll: all row DMAs issued back-to-back, no loop carry.
        for t in range(tok_blk):
            issue(t)
    else:
        # Partial unroll by 8 (tok_blk is always a multiple of 8).
        @pl.loop(0, tok_blk // 8)
        def _issue8(blk):
            t0 = pl.multiple_of(blk * 8, 8)
            for u in range(8):
                issue(t0 + u)

    # Single aggregate drain: total signalled bytes == full out block bytes.
    pltpu.make_async_copy(out_ref, out_ref, sem).wait()


@functools.partial(jax.jit, static_argnames=("tok_blk", "table_in_vmem"))
def _embed_lookup_padded(flat_ids, embed_table, *, tok_blk, table_in_vmem):
    n_padded = flat_ids.shape[0]
    d_vocab, d_model = embed_table.shape
    itemsize = jnp.dtype(embed_table.dtype).itemsize
    num_blocks = n_padded // tok_blk

    kernel = functools.partial(_embed_gather_kernel, tok_blk=tok_blk)

    if table_in_vmem:
        # Full-array VMEM block, same block index every step -> table stays
        # resident; row copies are VMEM-local.
        table_spec = pl.BlockSpec((d_vocab, d_model), lambda i, ids: (0, 0))
    else:
        # Table stays in HBM; rows gathered via HBM->VMEM DMAs.
        table_spec = pl.BlockSpec(memory_space=pl.ANY)

    grid_spec = pltpu.PrefetchScalarGridSpec(
        num_scalar_prefetch=1,                       # flat_ids -> SMEM
        grid=(num_blocks,),
        in_specs=[table_spec],
        out_specs=pl.BlockSpec((tok_blk, d_model), lambda i, ids: (i, 0)),
        scratch_shapes=[pltpu.SemaphoreType.DMA],
    )

    nbytes = n_padded * d_model * itemsize * 2 + n_padded * 4
    if table_in_vmem:
        nbytes += d_vocab * d_model * itemsize

    return pl.pallas_call(
        kernel,
        out_shape=jax.ShapeDtypeStruct((n_padded, d_model), embed_table.dtype),
        grid_spec=grid_spec,
        compiler_params=pltpu.CompilerParams(
            dimension_semantics=("parallel",),       # independent blocks: megacore
        ),
        cost_estimate=pl.CostEstimate(
            flops=0, transcendentals=0, bytes_accessed=int(nbytes)),
    )(flat_ids, embed_table)


def embed_forward(input_ids, embed_table, *, tok_blk=None, table_in_vmem=None):
    """Pallas embedding lookup: embed_table[input_ids]."""
    batch, position = input_ids.shape
    d_vocab, d_model = embed_table.shape
    num_tokens = batch * position
    itemsize = jnp.dtype(embed_table.dtype).itemsize

    # Sublane packing multiple for the output block's second-to-last dim:
    # 8 for f32, 16 for bf16, 32 for int8/fp8.
    sub = max(8, 32 // itemsize)

    # VMEM-aware token block: double-buffered (tok_blk, d_model) out block
    # must fit _OUT_VMEM_BUDGET (v7x: 64 MiB physical / 32 MiB scoped default;
    # v5e: 16 MiB scoped default).
    if tok_blk is None:
        cap = max(sub, _OUT_VMEM_BUDGET // (2 * d_model * itemsize))
        tok_blk = min(128, max(num_tokens, 1), cap)
    tok_blk = max(sub, _round_up(int(tok_blk), sub))

    # VMEM-resident-table fast path when it (double buffered) easily fits.
    if table_in_vmem is None:
        table_in_vmem = (2 * d_vocab * d_model * itemsize) <= _TABLE_VMEM_BUDGET

    padded = _round_up(max(num_tokens, 1), tok_blk)

    flat_ids = input_ids.reshape(num_tokens).astype(jnp.int32)
    # Bounds safety: an out-of-range id would drive the gather DMA outside the
    # table. NOTE: this silently clamps (PyTorch nn.Embedding would raise).
    flat_ids = jnp.clip(flat_ids, 0, d_vocab - 1)
    if padded != num_tokens:
        flat_ids = jnp.pad(flat_ids, (0, padded - num_tokens))

    # SMEM capacity guard: the scalar-prefetched id vector lives entirely in
    # SMEM, so split very long token streams across multiple pallas_calls.
    chunk = tok_blk * max(1, _MAX_SMEM_IDS // tok_blk)
    outs = []
    for s in range(0, padded, chunk):
        ids_c = flat_ids[s:min(s + chunk, padded)]
        outs.append(
            _embed_lookup_padded(ids_c, embed_table, tok_blk=tok_blk,
                                 table_in_vmem=bool(table_in_vmem)))
    out_flat = outs[0] if len(outs) == 1 else jnp.concatenate(outs, axis=0)
    return out_flat[:num_tokens].reshape(batch, position, d_model)


if __name__ == "__main__":
    # Small, TransformerConfig-consistent shapes.
    d_vocab = 64
    d_model = 128
    init_range = 0.02

    key = jax.random.PRNGKey(0)
    k_emb, k_ids, k_ids2, k_ids3 = jax.random.split(key, 4)

    # Deterministic parameter init (matches nn.init.normal_(std=init_range)).
    embed_table = init_range * jax.random.normal(
        k_emb, (d_vocab, d_model), dtype=jnp.float32
    )

    # 1) Small call -> VMEM-resident table fast path, single block.
    batch, position = 2, 8
    input_ids = jax.random.randint(
        k_ids, (batch, position), minval=0, maxval=d_vocab, dtype=jnp.int32
    )
    out = jax.block_until_ready(embed_forward(input_ids, embed_table))
    ref = embed_table[input_ids]
    assert out.shape == (batch, position, d_model)
    assert out.dtype == embed_table.dtype
    assert jnp.array_equal(out, ref), "mismatch (VMEM fast path, single block)"

    # 2) Forced HBM-gather path: odd token count, small token block, padding.
    batch2, position2 = 3, 17                        # 51 tokens -> pads to 56
    input_ids2 = jax.random.randint(
        k_ids2, (batch2, position2), minval=0, maxval=d_vocab, dtype=jnp.int32
    )
    out2 = jax.block_until_ready(
        embed_forward(input_ids2, embed_table, tok_blk=8, table_in_vmem=False))
    ref2 = embed_table[input_ids2]
    assert out2.shape == (batch2, position2, d_model)
    assert jnp.array_equal(out2, ref2), "mismatch (HBM DMA path, multi block)"

    # 3) Larger call -> default tok_blk=128, partial-unroll issue loop.
    batch3, position3 = 2, 128                       # 256 tokens, 2 blocks
    input_ids3 = jax.random.randint(
        k_ids3, (batch3, position3), minval=0, maxval=d_vocab, dtype=jnp.int32
    )
    out3 = jax.block_until_ready(embed_forward(input_ids3, embed_table))
    ref3 = embed_table[input_ids3]
    assert out3.shape == (batch3, position3, d_model)
    assert jnp.array_equal(out3, ref3), "mismatch (partial-unroll path)"

    print("KERNEL_OK")
</pallas_src>

<mosaic_0001>
module attributes {stable_mosaic.version = 11 : i64} {
  func.func @_embed_gather_kernel(%arg0: i32, %arg1: memref<16xi32, #tpu.memory_space<smem>>, %arg2: memref<64x128xf32, #tpu.memory_space<vmem>>, %arg3: memref<16x128xf32, #tpu.memory_space<vmem>>, %arg4: memref<!tpu.dma_semaphore, #tpu.memory_space<semaphore_mem>>) attributes {dimension_semantics = [#tpu.dimension_semantics<parallel>], iteration_bounds = array<i64: 1>, scalar_prefetch = 1 : i64, scratch_operands = 1 : i64, tpu.core_type = #tpu.core_type<tc>, window_params = [{pipeline_mode = #tpu.pipeline_mode<synchronous>, transform_indices = @transform_0, window_bounds = array<i64: 64, 128>}, {transform_indices = @transform_1, window_bounds = array<i64: 16, 128>}]} {
    %c16_i32 = arith.constant 16 : i32
    %0 = arith.muli %arg0, %c16_i32 : i32
    %c0_i32 = arith.constant 0 : i32
    %1 = arith.addi %0, %c0_i32 : i32
    %2 = arith.index_cast %1 : i32 to index
    %3 = memref.load %arg1[%2] : memref<16xi32, #tpu.memory_space<smem>>
    %c0_i32_0 = arith.constant 0 : i32
    %4 = tpu.memref_slice %arg2[%3, %c0_i32_0] : memref<64x128xf32, #tpu.memory_space<vmem>> -> memref<1x128xf32, #tpu.memory_space<vmem>>
    %c0_i32_1 = arith.constant 0 : i32
    %c0_i32_2 = arith.constant 0 : i32
    %5 = tpu.memref_slice %arg3[%c0_i32_1, %c0_i32_2] : memref<16x128xf32, #tpu.memory_space<vmem>> -> memref<1x128xf32, #tpu.memory_space<vmem>>
    tpu.enqueue_dma source(%4 : memref<1x128xf32, #tpu.memory_space<vmem>>) target(%5 : memref<1x128xf32, #tpu.memory_space<vmem>>) target_semaphore(%arg4 : memref<!tpu.dma_semaphore, #tpu.memory_space<semaphore_mem>>)
    %c1_i32 = arith.constant 1 : i32
    %6 = arith.addi %0, %c1_i32 : i32
    %7 = arith.index_cast %6 : i32 to index
    %8 = memref.load %arg1[%7] : memref<16xi32, #tpu.memory_space<smem>>
    %c0_i32_3 = arith.constant 0 : i32
    %9 = tpu.memref_slice %arg2[%8, %c0_i32_3] : memref<64x128xf32, #tpu.memory_space<vmem>> -> memref<1x128xf32, #tpu.memory_space<vmem>>
    %c1_i32_4 = arith.constant 1 : i32
    %c0_i32_5 = arith.constant 0 : i32
    %10 = tpu.memref_slice %arg3[%c1_i32_4, %c0_i32_5] : memref<16x128xf32, #tpu.memory_space<vmem>> -> memref<1x128xf32, #tpu.memory_space<vmem>>
    tpu.enqueue_dma source(%9 : memref<1x128xf32, #tpu.memory_space<vmem>>) target(%10 : memref<1x128xf32, #tpu.memory_space<vmem>>) target_semaphore(%arg4 : memref<!tpu.dma_semaphore, #tpu.memory_space<semaphore_mem>>)
    %c2_i32 = arith.constant 2 : i32
    %11 = arith.addi %0, %c2_i32 : i32
    %12 = arith.index_cast %11 : i32 to index
    %13 = memref.load %arg1[%12] : memref<16xi32, #tpu.memory_space<smem>>
    %c0_i32_6 = arith.constant 0 : i32
    %14 = tpu.memref_slice %arg2[%13, %c0_i32_6] : memref<64x128xf32, #tpu.memory_space<vmem>> -> memref<1x128xf32, #tpu.memory_space<vmem>>
    %c2_i32_7 = arith.constant 2 : i32
    %c0_i32_8 = arith.constant 0 : i32
    %15 = tpu.memref_slice %arg3[%c2_i32_7, %c0_i32_8] : memref<16x128xf32, #tpu.memory_space<vmem>> -> memref<1x128xf32, #tpu.memory_space<vmem>>
    tpu.enqueue_dma source(%14 : memref<1x128xf32, #tpu.memory_space<vmem>>) target(%15 : memref<1x128xf32, #tpu.memory_space<vmem>>) target_semaphore(%arg4 : memref<!tpu.dma_semaphore, #tpu.memory_space<semaphore_mem>>)
    %c3_i32 = arith.constant 3 : i32
    %16 = arith.addi %0, %c3_i32 : i32
    %17 = arith.index_cast %16 : i32 to index
    %18 = memref.load %arg1[%17] : memref<16xi32, #tpu.memory_space<smem>>
    %c0_i32_9 = arith.constant 0 : i32
    %19 = tpu.memref_slice %arg2[%18, %c0_i32_9] : memref<64x128xf32, #tpu.memory_space<vmem>> -> memref<1x128xf32, #tpu.memory_space<vmem>>
    %c3_i32_10 = arith.constant 3 : i32
    %c0_i32_11 = arith.constant 0 : i32
    %20 = tpu.memref_slice %arg3[%c3_i32_10, %c0_i32_11] : memref<16x128xf32, #tpu.memory_space<vmem>> -> memref<1x128xf32, #tpu.memory_space<vmem>>
    tpu.enqueue_dma source(%19 : memref<1x128xf32, #tpu.memory_space<vmem>>) target(%20 : memref<1x128xf32, #tpu.memory_space<vmem>>) target_semaphore(%arg4 : memref<!tpu.dma_semaphore, #tpu.memory_space<semaphore_mem>>)
    %c4_i32 = arith.constant 4 : i32
    %21 = arith.addi %0, %c4_i32 : i32
    %22 = arith.index_cast %21 : i32 to index
    %23 = memref.load %arg1[%22] : memref<16xi32, #tpu.memory_space<smem>>
    %c0_i32_12 = arith.constant 0 : i32
    %24 = tpu.memref_slice %arg2[%23, %c0_i32_12] : memref<64x128xf32, #tpu.memory_space<vmem>> -> memref<1x128xf32, #tpu.memory_space<vmem>>
    %c4_i32_13 = arith.constant 4 : i32
    %c0_i32_14 = arith.constant 0 : i32
    %25 = tpu.memref_slice %arg3[%c4_i32_13, %c0_i32_14] : memref<16x128xf32, #tpu.memory_space<vmem>> -> memref<1x128xf32, #tpu.memory_space<vmem>>
    tpu.enqueue_dma source(%24 : memref<1x128xf32, #tpu.memory_space<vmem>>) target(%25 : memref<1x128xf32, #tpu.memory_space<vmem>>) target_semaphore(%arg4 : memref<!tpu.dma_semaphore, #tpu.memory_space<semaphore_mem>>)
    %c5_i32 = arith.constant 5 : i32
    %26 = arith.addi %0, %c5_i32 : i32
    %27 = arith.index_cast %26 : i32 to index
    %28 = memref.load %arg1[%27] : memref<16xi32, #tpu.memory_space<smem>>
    %c0_i32_15 = arith.constant 0 : i32
    %29 = tpu.memref_slice %arg2[%28, %c0_i32_15] : memref<64x128xf32, #tpu.memory_space<vmem>> -> memref<1x128xf32, #tpu.memory_space<vmem>>
    %c5_i32_16 = arith.constant 5 : i32
    %c0_i32_17 = arith.constant 0 : i32
    %30 = tpu.memref_slice %arg3[%c5_i32_16, %c0_i32_17] : memref<16x128xf32, #tpu.memory_space<vmem>> -> memref<1x128xf32, #tpu.memory_space<vmem>>
    tpu.enqueue_dma source(%29 : memref<1x128xf32, #tpu.memory_space<vmem>>) target(%30 : memref<1x128xf32, #tpu.memory_space<vmem>>) target_semaphore(%arg4 : memref<!tpu.dma_semaphore, #tpu.memory_space<semaphore_mem>>)
    %c6_i32 = arith.constant 6 : i32
    %31 = arith.addi %0, %c6_i32 : i32
    %32 = arith.index_cast %31 : i32 to index
    %33 = memref.load %arg1[%32] : memref<16xi32, #tpu.memory_space<smem>>
    %c0_i32_18 = arith.constant 0 : i32
    %34 = tpu.memref_slice %arg2[%33, %c0_i32_18] : memref<64x128xf32, #tpu.memory_space<vmem>> -> memref<1x128xf32, #tpu.memory_space<vmem>>
    %c6_i32_19 = arith.constant 6 : i32
    %c0_i32_20 = arith.constant 0 : i32
    %35 = tpu.memref_slice %arg3[%c6_i32_19, %c0_i32_20] : memref<16x128xf32, #tpu.memory_space<vmem>> -> memref<1x128xf32, #tpu.memory_space<vmem>>
    tpu.enqueue_dma source(%34 : memref<1x128xf32, #tpu.memory_space<vmem>>) target(%35 : memref<1x128xf32, #tpu.memory_space<vmem>>) target_semaphore(%arg4 : memref<!tpu.dma_semaphore, #tpu.memory_space<semaphore_mem>>)
    %c7_i32 = arith.constant 7 : i32
    %36 = arith.addi %0, %c7_i32 : i32
    %37 = arith.index_cast %36 : i32 to index
    %38 = memref.load %arg1[%37] : memref<16xi32, #tpu.memory_space<smem>>
    %c0_i32_21 = arith.constant 0 : i32
    %39 = tpu.memref_slice %arg2[%38, %c0_i32_21] : memref<64x128xf32, #tpu.memory_space<vmem>> -> memref<1x128xf32, #tpu.memory_space<vmem>>
    %c7_i32_22 = arith.constant 7 : i32
    %c0_i32_23 = arith.constant 0 : i32
    %40 = tpu.memref_slice %arg3[%c7_i32_22, %c0_i32_23] : memref<16x128xf32, #tpu.memory_space<vmem>> -> memref<1x128xf32, #tpu.memory_space<vmem>>
    tpu.enqueue_dma source(%39 : memref<1x128xf32, #tpu.memory_space<vmem>>) target(%40 : memref<1x128xf32, #tpu.memory_space<vmem>>) target_semaphore(%arg4 : memref<!tpu.dma_semaphore, #tpu.memory_space<semaphore_mem>>)
    %c8_i32 = arith.constant 8 : i32
    %41 = arith.addi %0, %c8_i32 : i32
    %42 = arith.index_cast %41 : i32 to index
    %43 = memref.load %arg1[%42] : memref<16xi32, #tpu.memory_space<smem>>
    %c0_i32_24 = arith.constant 0 : i32
    %44 = tpu.memref_slice %arg2[%43, %c0_i32_24] : memref<64x128xf32, #tpu.memory_space<vmem>> -> memref<1x128xf32, #tpu.memory_space<vmem>>
    %c8_i32_25 = arith.constant 8 : i32
    %c0_i32_26 = arith.constant 0 : i32
    %45 = tpu.memref_slice %arg3[%c8_i32_25, %c0_i32_26] : memref<16x128xf32, #tpu.memory_space<vmem>> -> memref<1x128xf32, #tpu.memory_space<vmem>>
    tpu.enqueue_dma source(%44 : memref<1x128xf32, #tpu.memory_space<vmem>>) target(%45 : memref<1x128xf32, #tpu.memory_space<vmem>>) target_semaphore(%arg4 : memref<!tpu.dma_semaphore, #tpu.memory_space<semaphore_mem>>)
    %c9_i32 = arith.constant 9 : i32
    %46 = arith.addi %0, %c9_i32 : i32
    %47 = arith.index_cast %46 : i32 to index
    %48 = memref.load %arg1[%47] : memref<16xi32, #tpu.memory_space<smem>>
    %c0_i32_27 = arith.constant 0 : i32
    %49 = tpu.memref_slice %arg2[%48, %c0_i32_27] : memref<64x128xf32, #tpu.memory_space<vmem>> -> memref<1x128xf32, #tpu.memory_space<vmem>>
    %c9_i32_28 = arith.constant 9 : i32
    %c0_i32_29 = arith.constant 0 : i32
    %50 = tpu.memref_slice %arg3[%c9_i32_28, %c0_i32_29] : memref<16x128xf32, #tpu.memory_space<vmem>> -> memref<1x128xf32, #tpu.memory_space<vmem>>
    tpu.enqueue_dma source(%49 : memref<1x128xf32, #tpu.memory_space<vmem>>) target(%50 : memref<1x128xf32, #tpu.memory_space<vmem>>) target_semaphore(%arg4 : memref<!tpu.dma_semaphore, #tpu.memory_space<semaphore_mem>>)
    %c10_i32 = arith.constant 10 : i32
    %51 = arith.addi %0, %c10_i32 : i32
    %52 = arith.index_cast %51 : i32 to index
    %53 = memref.load %arg1[%52] : memref<16xi32, #tpu.memory_space<smem>>
    %c0_i32_30 = arith.constant 0 : i32
    %54 = tpu.memref_slice %arg2[%53, %c0_i32_30] : memref<64x128xf32, #tpu.memory_space<vmem>> -> memref<1x128xf32, #tpu.memory_space<vmem>>
    %c10_i32_31 = arith.constant 10 : i32
    %c0_i32_32 = arith.constant 0 : i32
    %55 = tpu.memref_slice %arg3[%c10_i32_31, %c0_i32_32] : memref<16x128xf32, #tpu.memory_space<vmem>> -> memref<1x128xf32, #tpu.memory_space<vmem>>
    tpu.enqueue_dma source(%54 : memref<1x128xf32, #tpu.memory_space<vmem>>) target(%55 : memref<1x128xf32, #tpu.memory_space<vmem>>) target_semaphore(%arg4 : memref<!tpu.dma_semaphore, #tpu.memory_space<semaphore_mem>>)
    %c11_i32 = arith.constant 11 : i32
    %56 = arith.addi %0, %c11_i32 : i32
    %57 = arith.index_cast %56 : i32 to index
    %58 = memref.load %arg1[%57] : memref<16xi32, #tpu.memory_space<smem>>
    %c0_i32_33 = arith.constant 0 : i32
    %59 = tpu.memref_slice %arg2[%58, %c0_i32_33] : memref<64x128xf32, #tpu.memory_space<vmem>> -> memref<1x128xf32, #tpu.memory_space<vmem>>
    %c11_i32_34 = arith.constant 11 : i32
    %c0_i32_35 = arith.constant 0 : i32
    %60 = tpu.memref_slice %arg3[%c11_i32_34, %c0_i32_35] : memref<16x128xf32, #tpu.memory_space<vmem>> -> memref<1x128xf32, #tpu.memory_space<vmem>>
    tpu.enqueue_dma source(%59 : memref<1x128xf32, #tpu.memory_space<vmem>>) target(%60 : memref<1x128xf32, #tpu.memory_space<vmem>>) target_semaphore(%arg4 : memref<!tpu.dma_semaphore, #tpu.memory_space<semaphore_mem>>)
    %c12_i32 = arith.constant 12 : i32
    %61 = arith.addi %0, %c12_i32 : i32
    %62 = arith.index_cast %61 : i32 to index
    %63 = memref.load %arg1[%62] : memref<16xi32, #tpu.memory_space<smem>>
    %c0_i32_36 = arith.constant 0 : i32
    %64 = tpu.memref_slice %arg2[%63, %c0_i32_36] : memref<64x128xf32, #tpu.memory_space<vmem>> -> memref<1x128xf32, #tpu.memory_space<vmem>>
    %c12_i32_37 = arith.constant 12 : i32
    %c0_i32_38 = arith.constant 0 : i32
    %65 = tpu.memref_slice %arg3[%c12_i32_37, %c0_i32_38] : memref<16x128xf32, #tpu.memory_space<vmem>> -> memref<1x128xf32, #tpu.memory_space<vmem>>
    tpu.enqueue_dma source(%64 : memref<1x128xf32, #tpu.memory_space<vmem>>) target(%65 : memref<1x128xf32, #tpu.memory_space<vmem>>) target_semaphore(%arg4 : memref<!tpu.dma_semaphore, #tpu.memory_space<semaphore_mem>>)
    %c13_i32 = arith.constant 13 : i32
    %66 = arith.addi %0, %c13_i32 : i32
    %67 = arith.index_cast %66 : i32 to index
    %68 = memref.load %arg1[%67] : memref<16xi32, #tpu.memory_space<smem>>
    %c0_i32_39 = arith.constant 0 : i32
    %69 = tpu.memref_slice %arg2[%68, %c0_i32_39] : memref<64x128xf32, #tpu.memory_space<vmem>> -> memref<1x128xf32, #tpu.memory_space<vmem>>
    %c13_i32_40 = arith.constant 13 : i32
    %c0_i32_41 = arith.constant 0 : i32
    %70 = tpu.memref_slice %arg3[%c13_i32_40, %c0_i32_41] : memref<16x128xf32, #tpu.memory_space<vmem>> -> memref<1x128xf32, #tpu.memory_space<vmem>>
    tpu.enqueue_dma source(%69 : memref<1x128xf32, #tpu.memory_space<vmem>>) target(%70 : memref<1x128xf32, #tpu.memory_space<vmem>>) target_semaphore(%arg4 : memref<!tpu.dma_semaphore, #tpu.memory_space<semaphore_mem>>)
    %c14_i32 = arith.constant 14 : i32
    %71 = arith.addi %0, %c14_i32 : i32
    %72 = arith.index_cast %71 : i32 to index
    %73 = memref.load %arg1[%72] : memref<16xi32, #tpu.memory_space<smem>>
    %c0_i32_42 = arith.constant 0 : i32
    %74 = tpu.memref_slice %arg2[%73, %c0_i32_42] : memref<64x128xf32, #tpu.memory_space<vmem>> -> memref<1x128xf32, #tpu.memory_space<vmem>>
    %c14_i32_43 = arith.constant 14 : i32
    %c0_i32_44 = arith.constant 0 : i32
    %75 = tpu.memref_slice %arg3[%c14_i32_43, %c0_i32_44] : memref<16x128xf32, #tpu.memory_space<vmem>> -> memref<1x128xf32, #tpu.memory_space<vmem>>
    tpu.enqueue_dma source(%74 : memref<1x128xf32, #tpu.memory_space<vmem>>) target(%75 : memref<1x128xf32, #tpu.memory_space<vmem>>) target_semaphore(%arg4 : memref<!tpu.dma_semaphore, #tpu.memory_space<semaphore_mem>>)
    %c15_i32 = arith.constant 15 : i32
    %76 = arith.addi %0, %c15_i32 : i32
    %77 = arith.index_cast %76 : i32 to index
    %78 = memref.load %arg1[%77] : memref<16xi32, #tpu.memory_space<smem>>
    %c0_i32_45 = arith.constant 0 : i32
    %79 = tpu.memref_slice %arg2[%78, %c0_i32_45] : memref<64x128xf32, #tpu.memory_space<vmem>> -> memref<1x128xf32, #tpu.memory_space<vmem>>
    %c15_i32_46 = arith.constant 15 : i32
    %c0_i32_47 = arith.constant 0 : i32
    %80 = tpu.memref_slice %arg3[%c15_i32_46, %c0_i32_47] : memref<16x128xf32, #tpu.memory_space<vmem>> -> memref<1x128xf32, #tpu.memory_space<vmem>>
    tpu.enqueue_dma source(%79 : memref<1x128xf32, #tpu.memory_space<vmem>>) target(%80 : memref<1x128xf32, #tpu.memory_space<vmem>>) target_semaphore(%arg4 : memref<!tpu.dma_semaphore, #tpu.memory_space<semaphore_mem>>)
    tpu.wait_dma2 semaphore(%arg4 : memref<!tpu.dma_semaphore, #tpu.memory_space<semaphore_mem>>) src(%arg3 : memref<16x128xf32, #tpu.memory_space<vmem>>) dst(%arg3 : memref<16x128xf32, #tpu.memory_space<vmem>>)
    return
  }
  func.func @transform_0(%arg0: i32, %arg1: memref<16xi32, #tpu.memory_space<smem>>) -> (i32, i32) {
    %c0_i32 = arith.constant 0 : i32
    %c0_i32_0 = arith.constant 0 : i32
    %c0_i32_1 = arith.constant 0 : i32
    return %c0_i32, %c0_i32_0 : i32, i32
  }
  func.func @transform_1(%arg0: i32, %arg1: memref<16xi32, #tpu.memory_space<smem>>) -> (i32, i32) {
    %c0_i32 = arith.constant 0 : i32
    %c0_i32_0 = arith.constant 0 : i32
    return %arg0, %c0_i32 : i32, i32
  }
}

</mosaic_0001>

<llo_original>
// kernel: _embed_lookup_padded.1
$region0: #{_embed_lookup_padded.1}
  #allocation0 [shape = 'u32[]', space=smem, size = 0x4, offset = 0x4, fixed_abs, tag = 'smem constant byte address 0x4 - core index']
  #allocation1 [shape = 'u32[144,128]{1,0:T(1,128)}', space=vmem, size = 0x12000, scoped, tag = 'internal scratch']
  #allocation2 [shape = 's32[1]{0}', space=sflag, size = 0x4, scoped, tag = 'scratch operand']
  #allocation3 [shape = 's32[1]{0}', space=sflag, size = 0x4, scoped, tag = 'scoped memory for _embed_lookup_padded.1']
  #allocation4 [shape = 'u8[512]{0}', space=smem, size = 0x200, scoped, tag = 'prefetched SMEM operand 0']
  #allocation9 [shape = 's32[]', space=sflag, size = 0x4, offset = 0, fixed_abs, tag = 'sflag constant byte address 0x0 - dummy sync flag']
  #allocation10 [shape = 's32[]', space=sflag, size = 0x4, offset = 0, fixed_abs, tag = 'sflag constant byte address 0x0 - dummy sync flag']
  #allocation11 [shape = 's32[]', space=sflag, size = 0x4, offset = 0, fixed_abs, tag = 'sflag constant byte address 0x0 - dummy sync flag']
  #allocation12 [shape = 's32[]', space=sflag, size = 0x4, offset = 0, fixed_abs, tag = 'sflag constant byte address 0x0 - dummy sync flag']
  #allocation13 [shape = 's32[]', space=sflag, size = 0x4, offset = 0, fixed_abs, tag = 'sflag constant byte address 0x0 - dummy sync flag']
  #allocation14 [shape = 's32[]', space=sflag, size = 0x4, offset = 0, fixed_abs, tag = 'sflag constant byte address 0x0 - dummy sync flag']
  #allocation15 [shape = 's32[]', space=sflag, size = 0x4, offset = 0, fixed_abs, tag = 'sflag constant byte address 0x0 - dummy sync flag']
  #allocation16 [shape = 's32[]', space=sflag, size = 0x4, offset = 0, fixed_abs, tag = 'sflag constant byte address 0x0 - dummy sync flag']
  #allocation17 [shape = 's32[]', space=sflag, size = 0x4, offset = 0, fixed_abs, tag = 'sflag constant byte address 0x0 - dummy sync flag']
  #allocation18 [shape = 's32[]', space=sflag, size = 0x4, offset = 0, fixed_abs, tag = 'sflag constant byte address 0x0 - dummy sync flag']
  #allocation19 [shape = 's32[]', space=sflag, size = 0x4, offset = 0, fixed_abs, tag = 'sflag constant byte address 0x0 - dummy sync flag']
  #allocation20 [shape = 's32[]', space=sflag, size = 0x4, offset = 0, fixed_abs, tag = 'sflag constant byte address 0x0 - dummy sync flag']
  #allocation21 [shape = 's32[]', space=sflag, size = 0x4, offset = 0, fixed_abs, tag = 'sflag constant byte address 0x0 - dummy sync flag']
  #allocation22 [shape = 's32[]', space=sflag, size = 0x4, offset = 0, fixed_abs, tag = 'sflag constant byte address 0x0 - dummy sync flag']
  #allocation23 [shape = 's32[]', space=sflag, size = 0x4, offset = 0, fixed_abs, tag = 'sflag constant byte address 0x0 - dummy sync flag']
  #allocation24 [shape = 's32[]', space=sflag, size = 0x4, offset = 0, fixed_abs, tag = 'sflag constant byte address 0x0 - dummy sync flag']
  %s0 = inlined_call_operand.hbm [shape: s32[16], index: 0, kind: input, shape index: {}]
  %s1 = inlined_call_operand.hbm [shape: f32[64,128], index: 1, kind: input, shape index: {}]
  %s2 = inlined_call_operand.hbm [shape: f32[16,128], index: 2, kind: output, shape index: {}]
  %s3 = sld [smem:[#allocation0]]
  $region498: #{_embed_lookup_padded.1} parent=0
    _
  %s5 = ssub.s32 1, %s3
  %s6 = scalar_select 0, %s5, %s3
  %8 = dma.hbm_to_smem %s0, 16, [#allocation4], [#allocation3]
  %9 = dma.done [#allocation3], 16
  %10 = sfence
  $region1: #{_embed_lookup_padded.1} parent=0
    #allocation5 [shape = 'u8[32768]{0}', space=vmem, size = 0x8000, scoped, tag = 'input window, operand 1, single buffered']
    #allocation6 [shape = 's32[1]{0}', space=sflag, size = 0x4, scoped, tag = 'scoped memory for _embed_lookup_padded.1']
    #allocation7 [shape = 's32[1]{0}', space=sflag, size = 0x4, scoped, tag = 'scoped memory for _embed_lookup_padded.1']
    #allocation8 [shape = 'u8[8192]{0}', space=vmem, size = 0x2000, scoped, tag = 'output window, operand 0, single buffered']
    %11 = vsyncpa [#allocation6], 0
    %12 = vsyncpa [#allocation7], 0
    // Predicated region
    $region2: #{_embed_lookup_padded.1} parent=1 // pred_check
      _
    $region3: #{_embed_lookup_padded.1} parent=1 // pred_check_branch
      %14 = sbr.rel (0) target = $region5
    $region4: #{_embed_lookup_padded.1} parent=1 // pred_region
      %s16 = ssub.s32 1024, 1024
      %17 = vsyncadd [#allocation6], %s16
      %s18 = sshll.u32 [#allocation5], 4
      %s19 = int_to_ptr.vmem [resolvable:$true] %s18
      %24 = dma.hbm_to_vmem [thread:$0]  %s1, 1024, %s19, [#allocation6], 128, 128, 8
    $region5: #{_embed_lookup_padded.1} parent=1 // pred_fallthru
      _
    // Predicated region
    $region6: #{_embed_lookup_padded.1} parent=1 // pred_check
      _
    $region7: #{_embed_lookup_padded.1} parent=1 // pred_check_branch
      %26 = sbr.rel (0) target = $region9
    $region8: #{_embed_lookup_padded.1} parent=1 // pred_region
      %27 = dma.done [#allocation6], 1024
    $region9: #{_embed_lookup_padded.1} parent=1 // pred_fallthru
      _
    %s28 = smul.u32 0, 16
    %s29 = sld [smem:[#allocation4 + %s28]]
    %s30 = scalar_lea.vmem [#allocation5], %s29
    %p32 = scmp.lt.u32.totalorder 1, 8
    %p33 = pneg %p32
    // Predicated region
    $region10: #{_embed_lookup_padded.1} parent=1 // pred_check
      _
    $region11: #{_embed_lookup_padded.1} parent=1 // pred_check_branch
      %35 = sbr.rel (%p32) target = $region13
    $region12: #{_embed_lookup_padded.1} parent=1 // pred_region
      %s50 = sand.u32 1, 7
      %p51 = scmp.eq.s32.totalorder %s50, 0
      %p52 = pneg %p51
      // Predicated region
      $region25: #{_embed_lookup_padded.1} parent=12 // pred_check
        _
      $region26: #{_embed_lookup_padded.1} parent=12 // pred_check_branch
        %54 = sbr.rel (%p51) target = $region28
      $region27: #{_embed_lookup_padded.1} parent=12 // pred_region
        %s55 = sand.u32 1, 7
        %s56 = ssub.s32 1, %s55
        %s57 = scalar_lea.vmem %s30, %s56 [#allocation5]
        %s58 = ssub.s32 1, %s55
        %s59 = scalar_lea.vmem [#allocation8], %s58
        %s60 = sshllo.u32 0, %s55
        loop: start=0, step=1, limit=1
        $region29: #{_embed_lookup_padded.1} parent=27 // loop_pre_header
          _
        $region30: #{_embed_lookup_padded.1} parent=27 // loop_header
          %s62 = sphi 0, %s66
          %p63 = scmp.ge.s32.totalorder %s62, 1
          %s67 = sphi %s57, %s57
          %s68 = sphi %s59, %s59
        $region31: #{_embed_lookup_padded.1} parent=27 // loop_header_branch
          %65 = sbr.rel (%p63) target = $region35
        $region32: #{_embed_lookup_padded.1} parent=27 // loop_body
          %v69 = vld [vmem:[%s67] sm:%s60]
          %70 = vst [vmem:[%s68] sm:%s60] %v69
        $region33: #{_embed_lookup_padded.1} parent=27 // loop_footer
          %s66 = sadd.s32 1, %s62
        $region34: #{_embed_lookup_padded.1} parent=27 // loop_footer_branch
          %61 = sbr.rel target = $region30
        $region35: #{_embed_lookup_padded.1} parent=27 // loop_exit
          _
      $region28: #{_embed_lookup_padded.1} parent=12 // pred_fallthru
        _
    $region13: #{_embed_lookup_padded.1} parent=1 // pred_fallthru
      _
    // Predicated region
    $region14: #{_embed_lookup_padded.1} parent=1 // pred_check
      %p36 = pneg %p32
    $region15: #{_embed_lookup_padded.1} parent=1 // pred_check_branch
      %38 = sbr.rel (%p36) target = $region17
    $region16: #{_embed_lookup_padded.1} parent=1 // pred_region
      %s39 = sshllo.u32 0, 1
      loop: start=0, step=1, limit=1
      $region18: #{_embed_lookup_padded.1} parent=16 // loop_pre_header
        _
      $region19: #{_embed_lookup_padded.1} parent=16 // loop_header
        %s41 = sphi 0, %s45
        %p42 = scmp.ge.s32.totalorder %s41, 1
        %s46 = sphi %s30, %s30
        %s47 = sphi [#allocation8], [#allocation8]
      $region20: #{_embed_lookup_padded.1} parent=16 // loop_header_branch
        %44 = sbr.rel (%p42) target = $region24
      $region21: #{_embed_lookup_padded.1} parent=16 // loop_body
        %v48 = vld [vmem:[%s46] sm:%s39]
        %49 = vst [vmem:[%s47] sm:%s39] %v48
      $region22: #{_embed_lookup_padded.1} parent=16 // loop_footer
        %s45 = sadd.s32 1, %s41
      $region23: #{_embed_lookup_padded.1} parent=16 // loop_footer_branch
        %40 = sbr.rel target = $region19
      $region24: #{_embed_lookup_padded.1} parent=16 // loop_exit
        _
    $region17: #{_embed_lookup_padded.1} parent=1 // pred_fallthru
      _
    // Predicated region
    $region36: #{_embed_lookup_padded.1} parent=1 // pred_check
      _
    $region37: #{_embed_lookup_padded.1} parent=1 // pred_check_branch
      %73 = sbr.rel (0) target = $region39
    $region38: #{_embed_lookup_padded.1} parent=1 // pred_region
      %74 = vsyncadd [#allocation2], 16
    $region39: #{_embed_lookup_padded.1} parent=1 // pred_fallthru
      _
    %s75 = sadd.s32 %s28, 1
    %s76 = sld [smem:[#allocation4 + %s75]]
    %s77 = scalar_lea.vmem [#allocation5], %s76
    %s78 = scalar_lea.vmem [#allocation8], 1
    %p80 = scmp.lt.u32.totalorder 1, 8
    %p81 = pneg %p80
    // Predicated region
    $region40: #{_embed_lookup_padded.1} parent=1 // pred_check
      _
    $region41: #{_embed_lookup_padded.1} parent=1 // pred_check_branch
      %83 = sbr.rel (%p80) target = $region43
    $region42: #{_embed_lookup_padded.1} parent=1 // pred_region
      %s98 = sand.u32 1, 7
      %p99 = scmp.eq.s32.totalorder %s98, 0
      %p100 = pneg %p99
      // Predicated region
      $region55: #{_embed_lookup_padded.1} parent=42 // pred_check
        _
      $region56: #{_embed_lookup_padded.1} parent=42 // pred_check_branch
        %102 = sbr.rel (%p99) target = $region58
      $region57: #{_embed_lookup_padded.1} parent=42 // pred_region
        %s103 = sand.u32 1, 7
        %s104 = ssub.s32 1, %s103
        %s105 = scalar_lea.vmem %s77, %s104 [#allocation5]
        %s106 = ssub.s32 1, %s103
        %s107 = scalar_lea.vmem %s78, %s106 [#allocation8]
        %s108 = sshllo.u32 0, %s103
        loop: start=0, step=1, limit=1
        $region59: #{_embed_lookup_padded.1} parent=57 // loop_pre_header
          _
        $region60: #{_embed_lookup_padded.1} parent=57 // loop_header
          %s110 = sphi 0, %s114
          %p111 = scmp.ge.s32.totalorder %s110, 1
          %s115 = sphi %s105, %s105
          %s116 = sphi %s107, %s107
        $region61: #{_embed_lookup_padded.1} parent=57 // loop_header_branch
          %113 = sbr.rel (%p111) target = $region65
        $region62: #{_embed_lookup_padded.1} parent=57 // loop_body
          %v117 = vld [vmem:[%s115] sm:%s108]
          %118 = vst [vmem:[%s116] sm:%s108] %v117
        $region63: #{_embed_lookup_padded.1} parent=57 // loop_footer
          %s114 = sadd.s32 1, %s110
        $region64: #{_embed_lookup_padded.1} parent=57 // loop_footer_branch
          %109 = sbr.rel target = $region60
        $region65: #{_embed_lookup_padded.1} parent=57 // loop_exit
          _
      $region58: #{_embed_lookup_padded.1} parent=42 // pred_fallthru
        _
    $region43: #{_embed_lookup_padded.1} parent=1 // pred_fallthru
      _
    // Predicated region
    $region44: #{_embed_lookup_padded.1} parent=1 // pred_check
      %p84 = pneg %p80
    $region45: #{_embed_lookup_padded.1} parent=1 // pred_check_branch
      %86 = sbr.rel (%p84) target = $region47
    $region46: #{_embed_lookup_padded.1} parent=1 // pred_region
      %s87 = sshllo.u32 0, 1
      loop: start=0, step=1, limit=1
      $region48: #{_embed_lookup_padded.1} parent=46 // loop_pre_header
        _
      $region49: #{_embed_lookup_padded.1} parent=46 // loop_header
        %s89 = sphi 0, %s93
        %p90 = scmp.ge.s32.totalorder %s89, 1
        %s94 = sphi %s77, %s77
        %s95 = sphi %s78, %s78
      $region50: #{_embed_lookup_padded.1} parent=46 // loop_header_branch
        %92 = sbr.rel (%p90) target = $region54
      $region51: #{_embed_lookup_padded.1} parent=46 // loop_body
        %v96 = vld [vmem:[%s94] sm:%s87]
        %97 = vst [vmem:[%s95] sm:%s87] %v96
      $region52: #{_embed_lookup_padded.1} parent=46 // loop_footer
        %s93 = sadd.s32 1, %s89
      $region53: #{_embed_lookup_padded.1} parent=46 // loop_footer_branch
        %88 = sbr.rel target = $region49
      $region54: #{_embed_lookup_padded.1} parent=46 // loop_exit
        _
    $region47: #{_embed_lookup_padded.1} parent=1 // pred_fallthru
      _
    // Predicated region
    $region66: #{_embed_lookup_padded.1} parent=1 // pred_check
      _
    $region67: #{_embed_lookup_padded.1} parent=1 // pred_check_branch
      %121 = sbr.rel (0) target = $region69
    $region68: #{_embed_lookup_padded.1} parent=1 // pred_region
      %122 = vsyncadd [#allocation2], 16
    $region69: #{_embed_lookup_padded.1} parent=1 // pred_fallthru
      _
    %s123 = sadd.s32 %s28, 2
    %s124 = sld [smem:[#allocation4 + %s123]]
    %s125 = scalar_lea.vmem [#allocation5], %s124
    %s126 = scalar_lea.vmem [#allocation8], 2
    %p128 = scmp.lt.u32.totalorder 1, 8
    %p129 = pneg %p128
    // Predicated region
    $region70: #{_embed_lookup_padded.1} parent=1 // pred_check
      _
    $region71: #{_embed_lookup_padded.1} parent=1 // pred_check_branch
      %131 = sbr.rel (%p128) target = $region73
    $region72: #{_embed_lookup_padded.1} parent=1 // pred_region
      %s146 = sand.u32 1, 7
      %p147 = scmp.eq.s32.totalorder %s146, 0
      %p148 = pneg %p147
      // Predicated region
      $region85: #{_embed_lookup_padded.1} parent=72 // pred_check
        _
      $region86: #{_embed_lookup_padded.1} parent=72 // pred_check_branch
        %150 = sbr.rel (%p147) target = $region88
      $region87: #{_embed_lookup_padded.1} parent=72 // pred_region
        %s151 = sand.u32 1, 7
        %s152 = ssub.s32 1, %s151
        %s153 = scalar_lea.vmem %s125, %s152 [#allocation5]
        %s154 = ssub.s32 1, %s151
        %s155 = scalar_lea.vmem %s126, %s154 [#allocation8]
        %s156 = sshllo.u32 0, %s151
        loop: start=0, step=1, limit=1
        $region89: #{_embed_lookup_padded.1} parent=87 // loop_pre_header
          _
        $region90: #{_embed_lookup_padded.1} parent=87 // loop_header
          %s158 = sphi 0, %s162
          %p159 = scmp.ge.s32.totalorder %s158, 1
          %s163 = sphi %s153, %s153
          %s164 = sphi %s155, %s155
        $region91: #{_embed_lookup_padded.1} parent=87 // loop_header_branch
          %161 = sbr.rel (%p159) target = $region95
        $region92: #{_embed_lookup_padded.1} parent=87 // loop_body
          %v165 = vld [vmem:[%s163] sm:%s156]
          %166 = vst [vmem:[%s164] sm:%s156] %v165
        $region93: #{_embed_lookup_padded.1} parent=87 // loop_footer
          %s162 = sadd.s32 1, %s158
        $region94: #{_embed_lookup_padded.1} parent=87 // loop_footer_branch
          %157 = sbr.rel target = $region90
        $region95: #{_embed_lookup_padded.1} parent=87 // loop_exit
          _
      $region88: #{_embed_lookup_padded.1} parent=72 // pred_fallthru
        _
    $region73: #{_embed_lookup_padded.1} parent=1 // pred_fallthru
      _
    // Predicated region
    $region74: #{_embed_lookup_padded.1} parent=1 // pred_check
      %p132 = pneg %p128
    $region75: #{_embed_lookup_padded.1} parent=1 // pred_check_branch
      %134 = sbr.rel (%p132) target = $region77
    $region76: #{_embed_lookup_padded.1} parent=1 // pred_region
      %s135 = sshllo.u32 0, 1
      loop: start=0, step=1, limit=1
      $region78: #{_embed_lookup_padded.1} parent=76 // loop_pre_header
        _
      $region79: #{_embed_lookup_padded.1} parent=76 // loop_header
        %s137 = sphi 0, %s141
        %p138 = scmp.ge.s32.totalorder %s137, 1
        %s142 = sphi %s125, %s125
        %s143 = sphi %s126, %s126
      $region80: #{_embed_lookup_padded.1} parent=76 // loop_header_branch
        %140 = sbr.rel (%p138) target = $region84
      $region81: #{_embed_lookup_padded.1} parent=76 // loop_body
        %v144 = vld [vmem:[%s142] sm:%s135]
        %145 = vst [vmem:[%s143] sm:%s135] %v144
      $region82: #{_embed_lookup_padded.1} parent=76 // loop_footer
        %s141 = sadd.s32 1, %s137
      $region83: #{_embed_lookup_padded.1} parent=76 // loop_footer_branch
        %136 = sbr.rel target = $region79
      $region84: #{_embed_lookup_padded.1} parent=76 // loop_exit
        _
    $region77: #{_embed_lookup_padded.1} parent=1 // pred_fallthru
      _
    // Predicated region
    $region96: #{_embed_lookup_padded.1} parent=1 // pred_check
      _
    $region97: #{_embed_lookup_padded.1} parent=1 // pred_check_branch
      %169 = sbr.rel (0) target = $region99
    $region98: #{_embed_lookup_padded.1} parent=1 // pred_region
      %170 = vsyncadd [#allocation2], 16
    $region99: #{_embed_lookup_padded.1} parent=1 // pred_fallthru
      _
    %s171 = sadd.s32 %s28, 3
    %s172 = sld [smem:[#allocation4 + %s171]]
    %s173 = scalar_lea.vmem [#allocation5], %s172
    %s174 = scalar_lea.vmem [#allocation8], 3
    %p176 = scmp.lt.u32.totalorder 1, 8
    %p177 = pneg %p176
    // Predicated region
    $region100: #{_embed_lookup_padded.1} parent=1 // pred_check
      _
    $region101: #{_embed_lookup_padded.1} parent=1 // pred_check_branch
      %179 = sbr.rel (%p176) target = $region103
    $region102: #{_embed_lookup_padded.1} parent=1 // pred_region
      %s194 = sand.u32 1, 7
      %p195 = scmp.eq.s32.totalorder %s194, 0
      %p196 = pneg %p195
      // Predicated region
      $region115: #{_embed_lookup_padded.1} parent=102 // pred_check
        _
      $region116: #{_embed_lookup_padded.1} parent=102 // pred_check_branch
        %198 = sbr.rel (%p195) target = $region118
      $region117: #{_embed_lookup_padded.1} parent=102 // pred_region
        %s199 = sand.u32 1, 7
        %s200 = ssub.s32 1, %s199
        %s201 = scalar_lea.vmem %s173, %s200 [#allocation5]
        %s202 = ssub.s32 1, %s199
        %s203 = scalar_lea.vmem %s174, %s202 [#allocation8]
        %s204 = sshllo.u32 0, %s199
        loop: start=0, step=1, limit=1
        $region119: #{_embed_lookup_padded.1} parent=117 // loop_pre_header
          _
        $region120: #{_embed_lookup_padded.1} parent=117 // loop_header
          %s206 = sphi 0, %s210
          %p207 = scmp.ge.s32.totalorder %s206, 1
          %s211 = sphi %s201, %s201
          %s212 = sphi %s203, %s203
        $region121: #{_embed_lookup_padded.1} parent=117 // loop_header_branch
          %209 = sbr.rel (%p207) target = $region125
        $region122: #{_embed_lookup_padded.1} parent=117 // loop_body
          %v213 = vld [vmem:[%s211] sm:%s204]
          %214 = vst [vmem:[%s212] sm:%s204] %v213
        $region123: #{_embed_lookup_padded.1} parent=117 // loop_footer
          %s210 = sadd.s32 1, %s206
        $region124: #{_embed_lookup_padded.1} parent=117 // loop_footer_branch
          %205 = sbr.rel target = $region120
        $region125: #{_embed_lookup_padded.1} parent=117 // loop_exit
          _
      $region118: #{_embed_lookup_padded.1} parent=102 // pred_fallthru
        _
    $region103: #{_embed_lookup_padded.1} parent=1 // pred_fallthru
      _
    // Predicated region
    $region104: #{_embed_lookup_padded.1} parent=1 // pred_check
      %p180 = pneg %p176
    $region105: #{_embed_lookup_padded.1} parent=1 // pred_check_branch
      %182 = sbr.rel (%p180) target = $region107
    $region106: #{_embed_lookup_padded.1} parent=1 // pred_region
      %s183 = sshllo.u32 0, 1
      loop: start=0, step=1, limit=1
      $region108: #{_embed_lookup_padded.1} parent=106 // loop_pre_header
        _
      $region109: #{_embed_lookup_padded.1} parent=106 // loop_header
        %s185 = sphi 0, %s189
        %p186 = scmp.ge.s32.totalorder %s185, 1
        %s190 = sphi %s173, %s173
        %s191 = sphi %s174, %s174
      $region110: #{_embed_lookup_padded.1} parent=106 // loop_header_branch
        %188 = sbr.rel (%p186) target = $region114
      $region111: #{_embed_lookup_padded.1} parent=106 // loop_body
        %v192 = vld [vmem:[%s190] sm:%s183]
        %193 = vst [vmem:[%s191] sm:%s183] %v192
      $region112: #{_embed_lookup_padded.1} parent=106 // loop_footer
        %s189 = sadd.s32 1, %s185
      $region113: #{_embed_lookup_padded.1} parent=106 // loop_footer_branch
        %184 = sbr.rel target = $region109
      $region114: #{_embed_lookup_padded.1} parent=106 // loop_exit
        _
    $region107: #{_embed_lookup_padded.1} parent=1 // pred_fallthru
      _
    // Predicated region
    $region126: #{_embed_lookup_padded.1} parent=1 // pred_check
      _
    $region127: #{_embed_lookup_padded.1} parent=1 // pred_check_branch
      %217 = sbr.rel (0) target = $region129
    $region128: #{_embed_lookup_padded.1} parent=1 // pred_region
      %218 = vsyncadd [#allocation2], 16
    $region129: #{_embed_lookup_padded.1} parent=1 // pred_fallthru
      _
    %s219 = sadd.s32 %s28, 4
    %s220 = sld [smem:[#allocation4 + %s219]]
    %s221 = scalar_lea.vmem [#allocation5], %s220
    %s222 = scalar_lea.vmem [#allocation8], 4
    %p224 = scmp.lt.u32.totalorder 1, 8
    %p225 = pneg %p224
    // Predicated region
    $region130: #{_embed_lookup_padded.1} parent=1 // pred_check
      _
    $region131: #{_embed_lookup_padded.1} parent=1 // pred_check_branch
      %227 = sbr.rel (%p224) target = $region133
    $region132: #{_embed_lookup_padded.1} parent=1 // pred_region
      %s242 = sand.u32 1, 7
      %p243 = scmp.eq.s32.totalorder %s242, 0
      %p244 = pneg %p243
      // Predicated region
      $region145: #{_embed_lookup_padded.1} parent=132 // pred_check
        _
      $region146: #{_embed_lookup_padded.1} parent=132 // pred_check_branch
        %246 = sbr.rel (%p243) target = $region148
      $region147: #{_embed_lookup_padded.1} parent=132 // pred_region
        %s247 = sand.u32 1, 7
        %s248 = ssub.s32 1, %s247
        %s249 = scalar_lea.vmem %s221, %s248 [#allocation5]
        %s250 = ssub.s32 1, %s247
        %s251 = scalar_lea.vmem %s222, %s250 [#allocation8]
        %s252 = sshllo.u32 0, %s247
        loop: start=0, step=1, limit=1
        $region149: #{_embed_lookup_padded.1} parent=147 // loop_pre_header
          _
        $region150: #{_embed_lookup_padded.1} parent=147 // loop_header
          %s254 = sphi 0, %s258
          %p255 = scmp.ge.s32.totalorder %s254, 1
          %s259 = sphi %s249, %s249
          %s260 = sphi %s251, %s251
        $region151: #{_embed_lookup_padded.1} parent=147 // loop_header_branch
          %257 = sbr.rel (%p255) target = $region155
        $region152: #{_embed_lookup_padded.1} parent=147 // loop_body
          %v261 = vld [vmem:[%s259] sm:%s252]
          %262 = vst [vmem:[%s260] sm:%s252] %v261
        $region153: #{_embed_lookup_padded.1} parent=147 // loop_footer
          %s258 = sadd.s32 1, %s254
        $region154: #{_embed_lookup_padded.1} parent=147 // loop_footer_branch
          %253 = sbr.rel target = $region150
        $region155: #{_embed_lookup_padded.1} parent=147 // loop_exit
          _
      $region148: #{_embed_lookup_padded.1} parent=132 // pred_fallthru
        _
    $region133: #{_embed_lookup_padded.1} parent=1 // pred_fallthru
      _
    // Predicated region
    $region134: #{_embed_lookup_padded.1} parent=1 // pred_check
      %p228 = pneg %p224
    $region135: #{_embed_lookup_padded.1} parent=1 // pred_check_branch
      %230 = sbr.rel (%p228) target = $region137
    $region136: #{_embed_lookup_padded.1} parent=1 // pred_region
      %s231 = sshllo.u32 0, 1
      loop: start=0, step=1, limit=1
      $region138: #{_embed_lookup_padded.1} parent=136 // loop_pre_header
        _
      $region139: #{_embed_lookup_padded.1} parent=136 // loop_header
        %s233 = sphi 0, %s237
        %p234 = scmp.ge.s32.totalorder %s233, 1
        %s238 = sphi %s221, %s221
        %s239 = sphi %s222, %s222
      $region140: #{_embed_lookup_padded.1} parent=136 // loop_header_branch
        %236 = sbr.rel (%p234) target = $region144
      $region141: #{_embed_lookup_padded.1} parent=136 // loop_body
        %v240 = vld [vmem:[%s238] sm:%s231]
        %241 = vst [vmem:[%s239] sm:%s231] %v240
      $region142: #{_embed_lookup_padded.1} parent=136 // loop_footer
        %s237 = sadd.s32 1, %s233
      $region143: #{_embed_lookup_padded.1} parent=136 // loop_footer_branch
        %232 = sbr.rel target = $region139
      $region144: #{_embed_lookup_padded.1} parent=136 // loop_exit
        _
    $region137: #{_embed_lookup_padded.1} parent=1 // pred_fallthru
      _
    // Predicated region
    $region156: #{_embed_lookup_padded.1} parent=1 // pred_check
      _
    $region157: #{_embed_lookup_padded.1} parent=1 // pred_check_branch
      %265 = sbr.rel (0) target = $region159
    $region158: #{_embed_lookup_padded.1} parent=1 // pred_region
      %266 = vsyncadd [#allocation2], 16
    $region159: #{_embed_lookup_padded.1} parent=1 // pred_fallthru
      _
    %s267 = sadd.s32 %s28, 5
    %s268 = sld [smem:[#allocation4 + %s267]]
    %s269 = scalar_lea.vmem [#allocation5], %s268
    %s270 = scalar_lea.vmem [#allocation8], 5
    %p272 = scmp.lt.u32.totalorder 1, 8
    %p273 = pneg %p272
    // Predicated region
    $region160: #{_embed_lookup_padded.1} parent=1 // pred_check
      _
    $region161: #{_embed_lookup_padded.1} parent=1 // pred_check_branch
      %275 = sbr.rel (%p272) target = $region163
    $region162: #{_embed_lookup_padded.1} parent=1 // pred_region
      %s290 = sand.u32 1, 7
      %p291 = scmp.eq.s32.totalorder %s290, 0
      %p292 = pneg %p291
      // Predicated region
      $region175: #{_embed_lookup_padded.1} parent=162 // pred_check
        _
      $region176: #{_embed_lookup_padded.1} parent=162 // pred_check_branch
        %294 = sbr.rel (%p291) target = $region178
      $region177: #{_embed_lookup_padded.1} parent=162 // pred_region
        %s295 = sand.u32 1, 7
        %s296 = ssub.s32 1, %s295
        %s297 = scalar_lea.vmem %s269, %s296 [#allocation5]
        %s298 = ssub.s32 1, %s295
        %s299 = scalar_lea.vmem %s270, %s298 [#allocation8]
        %s300 = sshllo.u32 0, %s295
        loop: start=0, step=1, limit=1
        $region179: #{_embed_lookup_padded.1} parent=177 // loop_pre_header
          _
        $region180: #{_embed_lookup_padded.1} parent=177 // loop_header
          %s302 = sphi 0, %s306
          %p303 = scmp.ge.s32.totalorder %s302, 1
          %s307 = sphi %s297, %s297
          %s308 = sphi %s299, %s299
        $region181: #{_embed_lookup_padded.1} parent=177 // loop_header_branch
          %305 = sbr.rel (%p303) target = $region185
        $region182: #{_embed_lookup_padded.1} parent=177 // loop_body
          %v309 = vld [vmem:[%s307] sm:%s300]
          %310 = vst [vmem:[%s308] sm:%s300] %v309
        $region183: #{_embed_lookup_padded.1} parent=177 // loop_footer
          %s306 = sadd.s32 1, %s302
        $region184: #{_embed_lookup_padded.1} parent=177 // loop_footer_branch
          %301 = sbr.rel target = $region180
        $region185: #{_embed_lookup_padded.1} parent=177 // loop_exit
          _
      $region178: #{_embed_lookup_padded.1} parent=162 // pred_fallthru
        _
    $region163: #{_embed_lookup_padded.1} parent=1 // pred_fallthru
      _
    // Predicated region
    $region164: #{_embed_lookup_padded.1} parent=1 // pred_check
      %p276 = pneg %p272
    $region165: #{_embed_lookup_padded.1} parent=1 // pred_check_branch
      %278 = sbr.rel (%p276) target = $region167
    $region166: #{_embed_lookup_padded.1} parent=1 // pred_region
      %s279 = sshllo.u32 0, 1
      loop: start=0, step=1, limit=1
      $region168: #{_embed_lookup_padded.1} parent=166 // loop_pre_header
        _
      $region169: #{_embed_lookup_padded.1} parent=166 // loop_header
        %s281 = sphi 0, %s285
        %p282 = scmp.ge.s32.totalorder %s281, 1
        %s286 = sphi %s269, %s269
        %s287 = sphi %s270, %s270
      $region170: #{_embed_lookup_padded.1} parent=166 // loop_header_branch
        %284 = sbr.rel (%p282) target = $region174
      $region171: #{_embed_lookup_padded.1} parent=166 // loop_body
        %v288 = vld [vmem:[%s286] sm:%s279]
        %289 = vst [vmem:[%s287] sm:%s279] %v288
      $region172: #{_embed_lookup_padded.1} parent=166 // loop_footer
        %s285 = sadd.s32 1, %s281
      $region173: #{_embed_lookup_padded.1} parent=166 // loop_footer_branch
        %280 = sbr.rel target = $region169
      $region174: #{_embed_lookup_padded.1} parent=166 // loop_exit
        _
    $region167: #{_embed_lookup_padded.1} parent=1 // pred_fallthru
      _
    // Predicated region
    $region186: #{_embed_lookup_padded.1} parent=1 // pred_check
      _
    $region187: #{_embed_lookup_padded.1} parent=1 // pred_check_branch
      %313 = sbr.rel (0) target = $region189
    $region188: #{_embed_lookup_padded.1} parent=1 // pred_region
      %314 = vsyncadd [#allocation2], 16
    $region189: #{_embed_lookup_padded.1} parent=1 // pred_fallthru
      _
    %s315 = sadd.s32 %s28, 6
    %s316 = sld [smem:[#allocation4 + %s315]]
    %s317 = scalar_lea.vmem [#allocation5], %s316
    %s318 = scalar_lea.vmem [#allocation8], 6
    %p320 = scmp.lt.u32.totalorder 1, 8
    %p321 = pneg %p320
    // Predicated region
    $region190: #{_embed_lookup_padded.1} parent=1 // pred_check
      _
    $region191: #{_embed_lookup_padded.1} parent=1 // pred_check_branch
      %323 = sbr.rel (%p320) target = $region193
    $region192: #{_embed_lookup_padded.1} parent=1 // pred_region
      %s338 = sand.u32 1, 7
      %p339 = scmp.eq.s32.totalorder %s338, 0
      %p340 = pneg %p339
      // Predicated region
      $region205: #{_embed_lookup_padded.1} parent=192 // pred_check
        _
      $region206: #{_embed_lookup_padded.1} parent=192 // pred_check_branch
        %342 = sbr.rel (%p339) target = $region208
      $region207: #{_embed_lookup_padded.1} parent=192 // pred_region
        %s343 = sand.u32 1, 7
        %s344 = ssub.s32 1, %s343
        %s345 = scalar_lea.vmem %s317, %s344 [#allocation5]
        %s346 = ssub.s32 1, %s343
        %s347 = scalar_lea.vmem %s318, %s346 [#allocation8]
        %s348 = sshllo.u32 0, %s343
        loop: start=0, step=1, limit=1
        $region209: #{_embed_lookup_padded.1} parent=207 // loop_pre_header
          _
        $region210: #{_embed_lookup_padded.1} parent=207 // loop_header
          %s350 = sphi 0, %s354
          %p351 = scmp.ge.s32.totalorder %s350, 1
          %s355 = sphi %s345, %s345
          %s356 = sphi %s347, %s347
        $region211: #{_embed_lookup_padded.1} parent=207 // loop_header_branch
          %353 = sbr.rel (%p351) target = $region215
        $region212: #{_embed_lookup_padded.1} parent=207 // loop_body
          %v357 = vld [vmem:[%s355] sm:%s348]
          %358 = vst [vmem:[%s356] sm:%s348] %v357
        $region213: #{_embed_lookup_padded.1} parent=207 // loop_footer
          %s354 = sadd.s32 1, %s350
        $region214: #{_embed_lookup_padded.1} parent=207 // loop_footer_branch
          %349 = sbr.rel target = $region210
        $region215: #{_embed_lookup_padded.1} parent=207 // loop_exit
          _
      $region208: #{_embed_lookup_padded.1} parent=192 // pred_fallthru
        _
    $region193: #{_embed_lookup_padded.1} parent=1 // pred_fallthru
      _
    // Predicated region
    $region194: #{_embed_lookup_padded.1} parent=1 // pred_check
      %p324 = pneg %p320
    $region195: #{_embed_lookup_padded.1} parent=1 // pred_check_branch
      %326 = sbr.rel (%p324) target = $region197
    $region196: #{_embed_lookup_padded.1} parent=1 // pred_region
      %s327 = sshllo.u32 0, 1
      loop: start=0, step=1, limit=1
      $region198: #{_embed_lookup_padded.1} parent=196 // loop_pre_header
        _
      $region199: #{_embed_lookup_padded.1} parent=196 // loop_header
        %s329 = sphi 0, %s333
        %p330 = scmp.ge.s32.totalorder %s329, 1
        %s334 = sphi %s317, %s317
        %s335 = sphi %s318, %s318
      $region200: #{_embed_lookup_padded.1} parent=196 // loop_header_branch
        %332 = sbr.rel (%p330) target = $region204
      $region201: #{_embed_lookup_padded.1} parent=196 // loop_body
        %v336 = vld [vmem:[%s334] sm:%s327]
        %337 = vst [vmem:[%s335] sm:%s327] %v336
      $region202: #{_embed_lookup_padded.1} parent=196 // loop_footer
        %s333 = sadd.s32 1, %s329
      $region203: #{_embed_lookup_padded.1} parent=196 // loop_footer_branch
        %328 = sbr.rel target = $region199
      $region204: #{_embed_lookup_padded.1} parent=196 // loop_exit
        _
    $region197: #{_embed_lookup_padded.1} parent=1 // pred_fallthru
      _
    // Predicated region
    $region216: #{_embed_lookup_padded.1} parent=1 // pred_check
      _
    $region217: #{_embed_lookup_padded.1} parent=1 // pred_check_branch
      %361 = sbr.rel (0) target = $region219
    $region218: #{_embed_lookup_padded.1} parent=1 // pred_region
      %362 = vsyncadd [#allocation2], 16
    $region219: #{_embed_lookup_padded.1} parent=1 // pred_fallthru
      _
    %s363 = sadd.s32 %s28, 7
    %s364 = sld [smem:[#allocation4 + %s363]]
    %s365 = scalar_lea.vmem [#allocation5], %s364
    %s366 = scalar_lea.vmem [#allocation8], 7
    %p368 = scmp.lt.u32.totalorder 1, 8
    %p369 = pneg %p368
    // Predicated region
    $region220: #{_embed_lookup_padded.1} parent=1 // pred_check
      _
    $region221: #{_embed_lookup_padded.1} parent=1 // pred_check_branch
      %371 = sbr.rel (%p368) target = $region223
    $region222: #{_embed_lookup_padded.1} parent=1 // pred_region
      %s386 = sand.u32 1, 7
      %p387 = scmp.eq.s32.totalorder %s386, 0
      %p388 = pneg %p387
      // Predicated region
      $region235: #{_embed_lookup_padded.1} parent=222 // pred_check
        _
      $region236: #{_embed_lookup_padded.1} parent=222 // pred_check_branch
        %390 = sbr.rel (%p387) target = $region238
      $region237: #{_embed_lookup_padded.1} parent=222 // pred_region
        %s391 = sand.u32 1, 7
        %s392 = ssub.s32 1, %s391
        %s393 = scalar_lea.vmem %s365, %s392 [#allocation5]
        %s394 = ssub.s32 1, %s391
        %s395 = scalar_lea.vmem %s366, %s394 [#allocation8]
        %s396 = sshllo.u32 0, %s391
        loop: start=0, step=1, limit=1
        $region239: #{_embed_lookup_padded.1} parent=237 // loop_pre_header
          _
        $region240: #{_embed_lookup_padded.1} parent=237 // loop_header
          %s398 = sphi 0, %s402
          %p399 = scmp.ge.s32.totalorder %s398, 1
          %s403 = sphi %s393, %s393
          %s404 = sphi %s395, %s395
        $region241: #{_embed_lookup_padded.1} parent=237 // loop_header_branch
          %401 = sbr.rel (%p399) target = $region245
        $region242: #{_embed_lookup_padded.1} parent=237 // loop_body
          %v405 = vld [vmem:[%s403] sm:%s396]
          %406 = vst [vmem:[%s404] sm:%s396] %v405
        $region243: #{_embed_lookup_padded.1} parent=237 // loop_footer
          %s402 = sadd.s32 1, %s398
        $region244: #{_embed_lookup_padded.1} parent=237 // loop_footer_branch
          %397 = sbr.rel target = $region240
        $region245: #{_embed_lookup_padded.1} parent=237 // loop_exit
          _
      $region238: #{_embed_lookup_padded.1} parent=222 // pred_fallthru
        _
    $region223: #{_embed_lookup_padded.1} parent=1 // pred_fallthru
      _
    // Predicated region
    $region224: #{_embed_lookup_padded.1} parent=1 // pred_check
      %p372 = pneg %p368
    $region225: #{_embed_lookup_padded.1} parent=1 // pred_check_branch
      %374 = sbr.rel (%p372) target = $region227
    $region226: #{_embed_lookup_padded.1} parent=1 // pred_region
      %s375 = sshllo.u32 0, 1
      loop: start=0, step=1, limit=1
      $region228: #{_embed_lookup_padded.1} parent=226 // loop_pre_header
        _
      $region229: #{_embed_lookup_padded.1} parent=226 // loop_header
        %s377 = sphi 0, %s381
        %p378 = scmp.ge.s32.totalorder %s377, 1
        %s382 = sphi %s365, %s365
        %s383 = sphi %s366, %s366
      $region230: #{_embed_lookup_padded.1} parent=226 // loop_header_branch
        %380 = sbr.rel (%p378) target = $region234
      $region231: #{_embed_lookup_padded.1} parent=226 // loop_body
        %v384 = vld [vmem:[%s382] sm:%s375]
        %385 = vst [vmem:[%s383] sm:%s375] %v384
      $region232: #{_embed_lookup_padded.1} parent=226 // loop_footer
        %s381 = sadd.s32 1, %s377
      $region233: #{_embed_lookup_padded.1} parent=226 // loop_footer_branch
        %376 = sbr.rel target = $region229
      $region234: #{_embed_lookup_padded.1} parent=226 // loop_exit
        _
    $region227: #{_embed_lookup_padded.1} parent=1 // pred_fallthru
      _
    // Predicated region
    $region246: #{_embed_lookup_padded.1} parent=1 // pred_check
      _
    $region247: #{_embed_lookup_padded.1} parent=1 // pred_check_branch
      %409 = sbr.rel (0) target = $region249
    $region248: #{_embed_lookup_padded.1} parent=1 // pred_region
      %410 = vsyncadd [#allocation2], 16
    $region249: #{_embed_lookup_padded.1} parent=1 // pred_fallthru
      _
    %s411 = sadd.s32 %s28, 8
    %s412 = sld [smem:[#allocation4 + %s411]]
    %s413 = scalar_lea.vmem [#allocation5], %s412
    %s414 = scalar_lea.vmem [#allocation8], 8
    %p416 = scmp.lt.u32.totalorder 1, 8
    %p417 = pneg %p416
    // Predicated region
    $region250: #{_embed_lookup_padded.1} parent=1 // pred_check
      _
    $region251: #{_embed_lookup_padded.1} parent=1 // pred_check_branch
      %419 = sbr.rel (%p416) target = $region253
    $region252: #{_embed_lookup_padded.1} parent=1 // pred_region
      %s434 = sand.u32 1, 7
      %p435 = scmp.eq.s32.totalorder %s434, 0
      %p436 = pneg %p435
      // Predicated region
      $region265: #{_embed_lookup_padded.1} parent=252 // pred_check
        _
      $region266: #{_embed_lookup_padded.1} parent=252 // pred_check_branch
        %438 = sbr.rel (%p435) target = $region268
      $region267: #{_embed_lookup_padded.1} parent=252 // pred_region
        %s439 = sand.u32 1, 7
        %s440 = ssub.s32 1, %s439
        %s441 = scalar_lea.vmem %s413, %s440 [#allocation5]
        %s442 = ssub.s32 1, %s439
        %s443 = scalar_lea.vmem %s414, %s442 [#allocation8]
        %s444 = sshllo.u32 0, %s439
        loop: start=0, step=1, limit=1
        $region269: #{_embed_lookup_padded.1} parent=267 // loop_pre_header
          _
        $region270: #{_embed_lookup_padded.1} parent=267 // loop_header
          %s446 = sphi 0, %s450
          %p447 = scmp.ge.s32.totalorder %s446, 1
          %s451 = sphi %s441, %s441
          %s452 = sphi %s443, %s443
        $region271: #{_embed_lookup_padded.1} parent=267 // loop_header_branch
          %449 = sbr.rel (%p447) target = $region275
        $region272: #{_embed_lookup_padded.1} parent=267 // loop_body
          %v453 = vld [vmem:[%s451] sm:%s444]
          %454 = vst [vmem:[%s452] sm:%s444] %v453
        $region273: #{_embed_lookup_padded.1} parent=267 // loop_footer
          %s450 = sadd.s32 1, %s446
        $region274: #{_embed_lookup_padded.1} parent=267 // loop_footer_branch
          %445 = sbr.rel target = $region270
        $region275: #{_embed_lookup_padded.1} parent=267 // loop_exit
          _
      $region268: #{_embed_lookup_padded.1} parent=252 // pred_fallthru
        _
    $region253: #{_embed_lookup_padded.1} parent=1 // pred_fallthru
      _
    // Predicated region
    $region254: #{_embed_lookup_padded.1} parent=1 // pred_check
      %p420 = pneg %p416
    $region255: #{_embed_lookup_padded.1} parent=1 // pred_check_branch
      %422 = sbr.rel (%p420) target = $region257
    $region256: #{_embed_lookup_padded.1} parent=1 // pred_region
      %s423 = sshllo.u32 0, 1
      loop: start=0, step=1, limit=1
      $region258: #{_embed_lookup_padded.1} parent=256 // loop_pre_header
        _
      $region259: #{_embed_lookup_padded.1} parent=256 // loop_header
        %s425 = sphi 0, %s429
        %p426 = scmp.ge.s32.totalorder %s425, 1
        %s430 = sphi %s413, %s413
        %s431 = sphi %s414, %s414
      $region260: #{_embed_lookup_padded.1} parent=256 // loop_header_branch
        %428 = sbr.rel (%p426) target = $region264
      $region261: #{_embed_lookup_padded.1} parent=256 // loop_body
        %v432 = vld [vmem:[%s430] sm:%s423]
        %433 = vst [vmem:[%s431] sm:%s423] %v432
      $region262: #{_embed_lookup_padded.1} parent=256 // loop_footer
        %s429 = sadd.s32 1, %s425
      $region263: #{_embed_lookup_padded.1} parent=256 // loop_footer_branch
        %424 = sbr.rel target = $region259
      $region264: #{_embed_lookup_padded.1} parent=256 // loop_exit
        _
    $region257: #{_embed_lookup_padded.1} parent=1 // pred_fallthru
      _
    // Predicated region
    $region276: #{_embed_lookup_padded.1} parent=1 // pred_check
      _
    $region277: #{_embed_lookup_padded.1} parent=1 // pred_check_branch
      %457 = sbr.rel (0) target = $region279
    $region278: #{_embed_lookup_padded.1} parent=1 // pred_region
      %458 = vsyncadd [#allocation2], 16
    $region279: #{_embed_lookup_padded.1} parent=1 // pred_fallthru
      _
    %s459 = sadd.s32 %s28, 9
    %s460 = sld [smem:[#allocation4 + %s459]]
    %s461 = scalar_lea.vmem [#allocation5], %s460
    %s462 = scalar_lea.vmem [#allocation8], 9
    %p464 = scmp.lt.u32.totalorder 1, 8
    %p465 = pneg %p464
    // Predicated region
    $region280: #{_embed_lookup_padded.1} parent=1 // pred_check
      _
    $region281: #{_embed_lookup_padded.1} parent=1 // pred_check_branch
      %467 = sbr.rel (%p464) target = $region283
    $region282: #{_embed_lookup_padded.1} parent=1 // pred_region
      %s482 = sand.u32 1, 7
      %p483 = scmp.eq.s32.totalorder %s482, 0
      %p484 = pneg %p483
      // Predicated region
      $region295: #{_embed_lookup_padded.1} parent=282 // pred_check
        _
      $region296: #{_embed_lookup_padded.1} parent=282 // pred_check_branch
        %486 = sbr.rel (%p483) target = $region298
      $region297: #{_embed_lookup_padded.1} parent=282 // pred_region
        %s487 = sand.u32 1, 7
        %s488 = ssub.s32 1, %s487
        %s489 = scalar_lea.vmem %s461, %s488 [#allocation5]
        %s490 = ssub.s32 1, %s487
        %s491 = scalar_lea.vmem %s462, %s490 [#allocation8]
        %s492 = sshllo.u32 0, %s487
        loop: start=0, step=1, limit=1
        $region299: #{_embed_lookup_padded.1} parent=297 // loop_pre_header
          _
        $region300: #{_embed_lookup_padded.1} parent=297 // loop_header
          %s494 = sphi 0, %s498
          %p495 = scmp.ge.s32.totalorder %s494, 1
          %s499 = sphi %s489, %s489
          %s500 = sphi %s491, %s491
        $region301: #{_embed_lookup_padded.1} parent=297 // loop_header_branch
          %497 = sbr.rel (%p495) target = $region305
        $region302: #{_embed_lookup_padded.1} parent=297 // loop_body
          %v501 = vld [vmem:[%s499] sm:%s492]
          %502 = vst [vmem:[%s500] sm:%s492] %v501
        $region303: #{_embed_lookup_padded.1} parent=297 // loop_footer
          %s498 = sadd.s32 1, %s494
        $region304: #{_embed_lookup_padded.1} parent=297 // loop_footer_branch
          %493 = sbr.rel target = $region300
        $region305: #{_embed_lookup_padded.1} parent=297 // loop_exit
          _
      $region298: #{_embed_lookup_padded.1} parent=282 // pred_fallthru
        _
    $region283: #{_embed_lookup_padded.1} parent=1 // pred_fallthru
      _
    // Predicated region
    $region284: #{_embed_lookup_padded.1} parent=1 // pred_check
      %p468 = pneg %p464
    $region285: #{_embed_lookup_padded.1} parent=1 // pred_check_branch
      %470 = sbr.rel (%p468) target = $region287
    $region286: #{_embed_lookup_padded.1} parent=1 // pred_region
      %s471 = sshllo.u32 0, 1
      loop: start=0, step=1, limit=1
      $region288: #{_embed_lookup_padded.1} parent=286 // loop_pre_header
        _
      $region289: #{_embed_lookup_padded.1} parent=286 // loop_header
        %s473 = sphi 0, %s477
        %p474 = scmp.ge.s32.totalorder %s473, 1
        %s478 = sphi %s461, %s461
        %s479 = sphi %s462, %s462
      $region290: #{_embed_lookup_padded.1} parent=286 // loop_header_branch
        %476 = sbr.rel (%p474) target = $region294
      $region291: #{_embed_lookup_padded.1} parent=286 // loop_body
        %v480 = vld [vmem:[%s478] sm:%s471]
        %481 = vst [vmem:[%s479] sm:%s471] %v480
      $region292: #{_embed_lookup_padded.1} parent=286 // loop_footer
        %s477 = sadd.s32 1, %s473
      $region293: #{_embed_lookup_padded.1} parent=286 // loop_footer_branch
        %472 = sbr.rel target = $region289
      $region294: #{_embed_lookup_padded.1} parent=286 // loop_exit
        _
    $region287: #{_embed_lookup_padded.1} parent=1 // pred_fallthru
      _
    // Predicated region
    $region306: #{_embed_lookup_padded.1} parent=1 // pred_check
      _
    $region307: #{_embed_lookup_padded.1} parent=1 // pred_check_branch
      %505 = sbr.rel (0) target = $region309
    $region308: #{_embed_lookup_padded.1} parent=1 // pred_region
      %506 = vsyncadd [#allocation2], 16
    $region309: #{_embed_lookup_padded.1} parent=1 // pred_fallthru
      _
    %s507 = sadd.s32 %s28, 10
    %s508 = sld [smem:[#allocation4 + %s507]]
    %s509 = scalar_lea.vmem [#allocation5], %s508
    %s510 = scalar_lea.vmem [#allocation8], 10
    %p512 = scmp.lt.u32.totalorder 1, 8
    %p513 = pneg %p512
    // Predicated region
    $region310: #{_embed_lookup_padded.1} parent=1 // pred_check
      _
    $region311: #{_embed_lookup_padded.1} parent=1 // pred_check_branch
      %515 = sbr.rel (%p512) target = $region313
    $region312: #{_embed_lookup_padded.1} parent=1 // pred_region
      %s530 = sand.u32 1, 7
      %p531 = scmp.eq.s32.totalorder %s530, 0
      %p532 = pneg %p531
      // Predicated region
      $region325: #{_embed_lookup_padded.1} parent=312 // pred_check
        _
      $region326: #{_embed_lookup_padded.1} parent=312 // pred_check_branch
        %534 = sbr.rel (%p531) target = $region328
      $region327: #{_embed_lookup_padded.1} parent=312 // pred_region
        %s535 = sand.u32 1, 7
        %s536 = ssub.s32 1, %s535
        %s537 = scalar_lea.vmem %s509, %s536 [#allocation5]
        %s538 = ssub.s32 1, %s535
        %s539 = scalar_lea.vmem %s510, %s538 [#allocation8]
        %s540 = sshllo.u32 0, %s535
        loop: start=0, step=1, limit=1
        $region329: #{_embed_lookup_padded.1} parent=327 // loop_pre_header
          _
        $region330: #{_embed_lookup_padded.1} parent=327 // loop_header
          %s542 = sphi 0, %s546
          %p543 = scmp.ge.s32.totalorder %s542, 1
          %s547 = sphi %s537, %s537
          %s548 = sphi %s539, %s539
        $region331: #{_embed_lookup_padded.1} parent=327 // loop_header_branch
          %545 = sbr.rel (%p543) target = $region335
        $region332: #{_embed_lookup_padded.1} parent=327 // loop_body
          %v549 = vld [vmem:[%s547] sm:%s540]
          %550 = vst [vmem:[%s548] sm:%s540] %v549
        $region333: #{_embed_lookup_padded.1} parent=327 // loop_footer
          %s546 = sadd.s32 1, %s542
        $region334: #{_embed_lookup_padded.1} parent=327 // loop_footer_branch
          %541 = sbr.rel target = $region330
        $region335: #{_embed_lookup_padded.1} parent=327 // loop_exit
          _
      $region328: #{_embed_lookup_padded.1} parent=312 // pred_fallthru
        _
    $region313: #{_embed_lookup_padded.1} parent=1 // pred_fallthru
      _
    // Predicated region
    $region314: #{_embed_lookup_padded.1} parent=1 // pred_check
      %p516 = pneg %p512
    $region315: #{_embed_lookup_padded.1} parent=1 // pred_check_branch
      %518 = sbr.rel (%p516) target = $region317
    $region316: #{_embed_lookup_padded.1} parent=1 // pred_region
      %s519 = sshllo.u32 0, 1
      loop: start=0, step=1, limit=1
      $region318: #{_embed_lookup_padded.1} parent=316 // loop_pre_header
        _
      $region319: #{_embed_lookup_padded.1} parent=316 // loop_header
        %s521 = sphi 0, %s525
        %p522 = scmp.ge.s32.totalorder %s521, 1
        %s526 = sphi %s509, %s509
        %s527 = sphi %s510, %s510
      $region320: #{_embed_lookup_padded.1} parent=316 // loop_header_branch
        %524 = sbr.rel (%p522) target = $region324
      $region321: #{_embed_lookup_padded.1} parent=316 // loop_body
        %v528 = vld [vmem:[%s526] sm:%s519]
        %529 = vst [vmem:[%s527] sm:%s519] %v528
      $region322: #{_embed_lookup_padded.1} parent=316 // loop_footer
        %s525 = sadd.s32 1, %s521
      $region323: #{_embed_lookup_padded.1} parent=316 // loop_footer_branch
        %520 = sbr.rel target = $region319
      $region324: #{_embed_lookup_padded.1} parent=316 // loop_exit
        _
    $region317: #{_embed_lookup_padded.1} parent=1 // pred_fallthru
      _
    // Predicated region
    $region336: #{_embed_lookup_padded.1} parent=1 // pred_check
      _
    $region337: #{_embed_lookup_padded.1} parent=1 // pred_check_branch
      %553 = sbr.rel (0) target = $region339
    $region338: #{_embed_lookup_padded.1} parent=1 // pred_region
      %554 = vsyncadd [#allocation2], 16
    $region339: #{_embed_lookup_padded.1} parent=1 // pred_fallthru
      _
    %s555 = sadd.s32 %s28, 11
    %s556 = sld [smem:[#allocation4 + %s555]]
    %s557 = scalar_lea.vmem [#allocation5], %s556
    %s558 = scalar_lea.vmem [#allocation8], 11
    %p560 = scmp.lt.u32.totalorder 1, 8
    %p561 = pneg %p560
    // Predicated region
    $region340: #{_embed_lookup_padded.1} parent=1 // pred_check
      _
    $region341: #{_embed_lookup_padded.1} parent=1 // pred_check_branch
      %563 = sbr.rel (%p560) target = $region343
    $region342: #{_embed_lookup_padded.1} parent=1 // pred_region
      %s578 = sand.u32 1, 7
      %p579 = scmp.eq.s32.totalorder %s578, 0
      %p580 = pneg %p579
      // Predicated region
      $region355: #{_embed_lookup_padded.1} parent=342 // pred_check
        _
      $region356: #{_embed_lookup_padded.1} parent=342 // pred_check_branch
        %582 = sbr.rel (%p579) target = $region358
      $region357: #{_embed_lookup_padded.1} parent=342 // pred_region
        %s583 = sand.u32 1, 7
        %s584 = ssub.s32 1, %s583
        %s585 = scalar_lea.vmem %s557, %s584 [#allocation5]
        %s586 = ssub.s32 1, %s583
        %s587 = scalar_lea.vmem %s558, %s586 [#allocation8]
        %s588 = sshllo.u32 0, %s583
        loop: start=0, step=1, limit=1
        $region359: #{_embed_lookup_padded.1} parent=357 // loop_pre_header
          _
        $region360: #{_embed_lookup_padded.1} parent=357 // loop_header
          %s590 = sphi 0, %s594
          %p591 = scmp.ge.s32.totalorder %s590, 1
          %s595 = sphi %s585, %s585
          %s596 = sphi %s587, %s587
        $region361: #{_embed_lookup_padded.1} parent=357 // loop_header_branch
          %593 = sbr.rel (%p591) target = $region365
        $region362: #{_embed_lookup_padded.1} parent=357 // loop_body
          %v597 = vld [vmem:[%s595] sm:%s588]
          %598 = vst [vmem:[%s596] sm:%s588] %v597
        $region363: #{_embed_lookup_padded.1} parent=357 // loop_footer
          %s594 = sadd.s32 1, %s590
        $region364: #{_embed_lookup_padded.1} parent=357 // loop_footer_branch
          %589 = sbr.rel target = $region360
        $region365: #{_embed_lookup_padded.1} parent=357 // loop_exit
          _
      $region358: #{_embed_lookup_padded.1} parent=342 // pred_fallthru
        _
    $region343: #{_embed_lookup_padded.1} parent=1 // pred_fallthru
      _
    // Predicated region
    $region344: #{_embed_lookup_padded.1} parent=1 // pred_check
      %p564 = pneg %p560
    $region345: #{_embed_lookup_padded.1} parent=1 // pred_check_branch
      %566 = sbr.rel (%p564) target = $region347
    $region346: #{_embed_lookup_padded.1} parent=1 // pred_region
      %s567 = sshllo.u32 0, 1
      loop: start=0, step=1, limit=1
      $region348: #{_embed_lookup_padded.1} parent=346 // loop_pre_header
        _
      $region349: #{_embed_lookup_padded.1} parent=346 // loop_header
        %s569 = sphi 0, %s573
        %p570 = scmp.ge.s32.totalorder %s569, 1
        %s574 = sphi %s557, %s557
        %s575 = sphi %s558, %s558
      $region350: #{_embed_lookup_padded.1} parent=346 // loop_header_branch
        %572 = sbr.rel (%p570) target = $region354
      $region351: #{_embed_lookup_padded.1} parent=346 // loop_body
        %v576 = vld [vmem:[%s574] sm:%s567]
        %577 = vst [vmem:[%s575] sm:%s567] %v576
      $region352: #{_embed_lookup_padded.1} parent=346 // loop_footer
        %s573 = sadd.s32 1, %s569
      $region353: #{_embed_lookup_padded.1} parent=346 // loop_footer_branch
        %568 = sbr.rel target = $region349
      $region354: #{_embed_lookup_padded.1} parent=346 // loop_exit
        _
    $region347: #{_embed_lookup_padded.1} parent=1 // pred_fallthru
      _
    // Predicated region
    $region366: #{_embed_lookup_padded.1} parent=1 // pred_check
      _
    $region367: #{_embed_lookup_padded.1} parent=1 // pred_check_branch
      %601 = sbr.rel (0) target = $region369
    $region368: #{_embed_lookup_padded.1} parent=1 // pred_region
      %602 = vsyncadd [#allocation2], 16
    $region369: #{_embed_lookup_padded.1} parent=1 // pred_fallthru
      _
    %s603 = sadd.s32 %s28, 12
    %s604 = sld [smem:[#allocation4 + %s603]]
    %s605 = scalar_lea.vmem [#allocation5], %s604
    %s606 = scalar_lea.vmem [#allocation8], 12
    %p608 = scmp.lt.u32.totalorder 1, 8
    %p609 = pneg %p608
    // Predicated region
    $region370: #{_embed_lookup_padded.1} parent=1 // pred_check
      _
    $region371: #{_embed_lookup_padded.1} parent=1 // pred_check_branch
      %611 = sbr.rel (%p608) target = $region373
    $region372: #{_embed_lookup_padded.1} parent=1 // pred_region
      %s626 = sand.u32 1, 7
      %p627 = scmp.eq.s32.totalorder %s626, 0
      %p628 = pneg %p627
      // Predicated region
      $region385: #{_embed_lookup_padded.1} parent=372 // pred_check
        _
      $region386: #{_embed_lookup_padded.1} parent=372 // pred_check_branch
        %630 = sbr.rel (%p627) target = $region388
      $region387: #{_embed_lookup_padded.1} parent=372 // pred_region
        %s631 = sand.u32 1, 7
        %s632 = ssub.s32 1, %s631
        %s633 = scalar_lea.vmem %s605, %s632 [#allocation5]
        %s634 = ssub.s32 1, %s631
        %s635 = scalar_lea.vmem %s606, %s634 [#allocation8]
        %s636 = sshllo.u32 0, %s631
        loop: start=0, step=1, limit=1
        $region389: #{_embed_lookup_padded.1} parent=387 // loop_pre_header
          _
        $region390: #{_embed_lookup_padded.1} parent=387 // loop_header
          %s638 = sphi 0, %s642
          %p639 = scmp.ge.s32.totalorder %s638, 1
          %s643 = sphi %s633, %s633
          %s644 = sphi %s635, %s635
        $region391: #{_embed_lookup_padded.1} parent=387 // loop_header_branch
          %641 = sbr.rel (%p639) target = $region395
        $region392: #{_embed_lookup_padded.1} parent=387 // loop_body
          %v645 = vld [vmem:[%s643] sm:%s636]
          %646 = vst [vmem:[%s644] sm:%s636] %v645
        $region393: #{_embed_lookup_padded.1} parent=387 // loop_footer
          %s642 = sadd.s32 1, %s638
        $region394: #{_embed_lookup_padded.1} parent=387 // loop_footer_branch
          %637 = sbr.rel target = $region390
        $region395: #{_embed_lookup_padded.1} parent=387 // loop_exit
          _
      $region388: #{_embed_lookup_padded.1} parent=372 // pred_fallthru
        _
    $region373: #{_embed_lookup_padded.1} parent=1 // pred_fallthru
      _
    // Predicated region
    $region374: #{_embed_lookup_padded.1} parent=1 // pred_check
      %p612 = pneg %p608
    $region375: #{_embed_lookup_padded.1} parent=1 // pred_check_branch
      %614 = sbr.rel (%p612) target = $region377
    $region376: #{_embed_lookup_padded.1} parent=1 // pred_region
      %s615 = sshllo.u32 0, 1
      loop: start=0, step=1, limit=1
      $region378: #{_embed_lookup_padded.1} parent=376 // loop_pre_header
        _
      $region379: #{_embed_lookup_padded.1} parent=376 // loop_header
        %s617 = sphi 0, %s621
        %p618 = scmp.ge.s32.totalorder %s617, 1
        %s622 = sphi %s605, %s605
        %s623 = sphi %s606, %s606
      $region380: #{_embed_lookup_padded.1} parent=376 // loop_header_branch
        %620 = sbr.rel (%p618) target = $region384
      $region381: #{_embed_lookup_padded.1} parent=376 // loop_body
        %v624 = vld [vmem:[%s622] sm:%s615]
        %625 = vst [vmem:[%s623] sm:%s615] %v624
      $region382: #{_embed_lookup_padded.1} parent=376 // loop_footer
        %s621 = sadd.s32 1, %s617
      $region383: #{_embed_lookup_padded.1} parent=376 // loop_footer_branch
        %616 = sbr.rel target = $region379
      $region384: #{_embed_lookup_padded.1} parent=376 // loop_exit
        _
    $region377: #{_embed_lookup_padded.1} parent=1 // pred_fallthru
      _
    // Predicated region
    $region396: #{_embed_lookup_padded.1} parent=1 // pred_check
      _
    $region397: #{_embed_lookup_padded.1} parent=1 // pred_check_branch
      %649 = sbr.rel (0) target = $region399
    $region398: #{_embed_lookup_padded.1} parent=1 // pred_region
      %650 = vsyncadd [#allocation2], 16
    $region399: #{_embed_lookup_padded.1} parent=1 // pred_fallthru
      _
    %s651 = sadd.s32 %s28, 13
    %s652 = sld [smem:[#allocation4 + %s651]]
    %s653 = scalar_lea.vmem [#allocation5], %s652
    %s654 = scalar_lea.vmem [#allocation8], 13
    %p656 = scmp.lt.u32.totalorder 1, 8
    %p657 = pneg %p656
    // Predicated region
    $region400: #{_embed_lookup_padded.1} parent=1 // pred_check
      _
    $region401: #{_embed_lookup_padded.1} parent=1 // pred_check_branch
      %659 = sbr.rel (%p656) target = $region403
    $region402: #{_embed_lookup_padded.1} parent=1 // pred_region
      %s674 = sand.u32 1, 7
      %p675 = scmp.eq.s32.totalorder %s674, 0
      %p676 = pneg %p675
      // Predicated region
      $region415: #{_embed_lookup_padded.1} parent=402 // pred_check
        _
      $region416: #{_embed_lookup_padded.1} parent=402 // pred_check_branch
        %678 = sbr.rel (%p675) target = $region418
      $region417: #{_embed_lookup_padded.1} parent=402 // pred_region
        %s679 = sand.u32 1, 7
        %s680 = ssub.s32 1, %s679
        %s681 = scalar_lea.vmem %s653, %s680 [#allocation5]
        %s682 = ssub.s32 1, %s679
        %s683 = scalar_lea.vmem %s654, %s682 [#allocation8]
        %s684 = sshllo.u32 0, %s679
        loop: start=0, step=1, limit=1
        $region419: #{_embed_lookup_padded.1} parent=417 // loop_pre_header
          _
        $region420: #{_embed_lookup_padded.1} parent=417 // loop_header
          %s686 = sphi 0, %s690
          %p687 = scmp.ge.s32.totalorder %s686, 1
          %s691 = sphi %s681, %s681
          %s692 = sphi %s683, %s683
        $region421: #{_embed_lookup_padded.1} parent=417 // loop_header_branch
          %689 = sbr.rel (%p687) target = $region425
        $region422: #{_embed_lookup_padded.1} parent=417 // loop_body
          %v693 = vld [vmem:[%s691] sm:%s684]
          %694 = vst [vmem:[%s692] sm:%s684] %v693
        $region423: #{_embed_lookup_padded.1} parent=417 // loop_footer
          %s690 = sadd.s32 1, %s686
        $region424: #{_embed_lookup_padded.1} parent=417 // loop_footer_branch
          %685 = sbr.rel target = $region420
        $region425: #{_embed_lookup_padded.1} parent=417 // loop_exit
          _
      $region418: #{_embed_lookup_padded.1} parent=402 // pred_fallthru
        _
    $region403: #{_embed_lookup_padded.1} parent=1 // pred_fallthru
      _
    // Predicated region
    $region404: #{_embed_lookup_padded.1} parent=1 // pred_check
      %p660 = pneg %p656
    $region405: #{_embed_lookup_padded.1} parent=1 // pred_check_branch
      %662 = sbr.rel (%p660) target = $region407
    $region406: #{_embed_lookup_padded.1} parent=1 // pred_region
      %s663 = sshllo.u32 0, 1
      loop: start=0, step=1, limit=1
      $region408: #{_embed_lookup_padded.1} parent=406 // loop_pre_header
        _
      $region409: #{_embed_lookup_padded.1} parent=406 // loop_header
        %s665 = sphi 0, %s669
        %p666 = scmp.ge.s32.totalorder %s665, 1
        %s670 = sphi %s653, %s653
        %s671 = sphi %s654, %s654
      $region410: #{_embed_lookup_padded.1} parent=406 // loop_header_branch
        %668 = sbr.rel (%p666) target = $region414
      $region411: #{_embed_lookup_padded.1} parent=406 // loop_body
        %v672 = vld [vmem:[%s670] sm:%s663]
        %673 = vst [vmem:[%s671] sm:%s663] %v672
      $region412: #{_embed_lookup_padded.1} parent=406 // loop_footer
        %s669 = sadd.s32 1, %s665
      $region413: #{_embed_lookup_padded.1} parent=406 // loop_footer_branch
        %664 = sbr.rel target = $region409
      $region414: #{_embed_lookup_padded.1} parent=406 // loop_exit
        _
    $region407: #{_embed_lookup_padded.1} parent=1 // pred_fallthru
      _
    // Predicated region
    $region426: #{_embed_lookup_padded.1} parent=1 // pred_check
      _
    $region427: #{_embed_lookup_padded.1} parent=1 // pred_check_branch
      %697 = sbr.rel (0) target = $region429
    $region428: #{_embed_lookup_padded.1} parent=1 // pred_region
      %698 = vsyncadd [#allocation2], 16
    $region429: #{_embed_lookup_padded.1} parent=1 // pred_fallthru
      _
    %s699 = sadd.s32 %s28, 14
    %s700 = sld [smem:[#allocation4 + %s699]]
    %s701 = scalar_lea.vmem [#allocation5], %s700
    %s702 = scalar_lea.vmem [#allocation8], 14
    %p704 = scmp.lt.u32.totalorder 1, 8
    %p705 = pneg %p704
    // Predicated region
    $region430: #{_embed_lookup_padded.1} parent=1 // pred_check
      _
    $region431: #{_embed_lookup_padded.1} parent=1 // pred_check_branch
      %707 = sbr.rel (%p704) target = $region433
    $region432: #{_embed_lookup_padded.1} parent=1 // pred_region
      %s722 = sand.u32 1, 7
      %p723 = scmp.eq.s32.totalorder %s722, 0
      %p724 = pneg %p723
      // Predicated region
      $region445: #{_embed_lookup_padded.1} parent=432 // pred_check
        _
      $region446: #{_embed_lookup_padded.1} parent=432 // pred_check_branch
        %726 = sbr.rel (%p723) target = $region448
      $region447: #{_embed_lookup_padded.1} parent=432 // pred_region
        %s727 = sand.u32 1, 7
        %s728 = ssub.s32 1, %s727
        %s729 = scalar_lea.vmem %s701, %s728 [#allocation5]
        %s730 = ssub.s32 1, %s727
        %s731 = scalar_lea.vmem %s702, %s730 [#allocation8]
        %s732 = sshllo.u32 0, %s727
        loop: start=0, step=1, limit=1
        $region449: #{_embed_lookup_padded.1} parent=447 // loop_pre_header
          _
        $region450: #{_embed_lookup_padded.1} parent=447 // loop_header
          %s734 = sphi 0, %s738
          %p735 = scmp.ge.s32.totalorder %s734, 1
          %s739 = sphi %s729, %s729
          %s740 = sphi %s731, %s731
        $region451: #{_embed_lookup_padded.1} parent=447 // loop_header_branch
          %737 = sbr.rel (%p735) target = $region455
        $region452: #{_embed_lookup_padded.1} parent=447 // loop_body
          %v741 = vld [vmem:[%s739] sm:%s732]
          %742 = vst [vmem:[%s740] sm:%s732] %v741
        $region453: #{_embed_lookup_padded.1} parent=447 // loop_footer
          %s738 = sadd.s32 1, %s734
        $region454: #{_embed_lookup_padded.1} parent=447 // loop_footer_branch
          %733 = sbr.rel target = $region450
        $region455: #{_embed_lookup_padded.1} parent=447 // loop_exit
          _
      $region448: #{_embed_lookup_padded.1} parent=432 // pred_fallthru
        _
    $region433: #{_embed_lookup_padded.1} parent=1 // pred_fallthru
      _
    // Predicated region
    $region434: #{_embed_lookup_padded.1} parent=1 // pred_check
      %p708 = pneg %p704
    $region435: #{_embed_lookup_padded.1} parent=1 // pred_check_branch
      %710 = sbr.rel (%p708) target = $region437
    $region436: #{_embed_lookup_padded.1} parent=1 // pred_region
      %s711 = sshllo.u32 0, 1
      loop: start=0, step=1, limit=1
      $region438: #{_embed_lookup_padded.1} parent=436 // loop_pre_header
        _
      $region439: #{_embed_lookup_padded.1} parent=436 // loop_header
        %s713 = sphi 0, %s717
        %p714 = scmp.ge.s32.totalorder %s713, 1
        %s718 = sphi %s701, %s701
        %s719 = sphi %s702, %s702
      $region440: #{_embed_lookup_padded.1} parent=436 // loop_header_branch
        %716 = sbr.rel (%p714) target = $region444
      $region441: #{_embed_lookup_padded.1} parent=436 // loop_body
        %v720 = vld [vmem:[%s718] sm:%s711]
        %721 = vst [vmem:[%s719] sm:%s711] %v720
      $region442: #{_embed_lookup_padded.1} parent=436 // loop_footer
        %s717 = sadd.s32 1, %s713
      $region443: #{_embed_lookup_padded.1} parent=436 // loop_footer_branch
        %712 = sbr.rel target = $region439
      $region444: #{_embed_lookup_padded.1} parent=436 // loop_exit
        _
    $region437: #{_embed_lookup_padded.1} parent=1 // pred_fallthru
      _
    // Predicated region
    $region456: #{_embed_lookup_padded.1} parent=1 // pred_check
      _
    $region457: #{_embed_lookup_padded.1} parent=1 // pred_check_branch
      %745 = sbr.rel (0) target = $region459
    $region458: #{_embed_lookup_padded.1} parent=1 // pred_region
      %746 = vsyncadd [#allocation2], 16
    $region459: #{_embed_lookup_padded.1} parent=1 // pred_fallthru
      _
    %s747 = sadd.s32 %s28, 15
    %s748 = sld [smem:[#allocation4 + %s747]]
    %s749 = scalar_lea.vmem [#allocation5], %s748
    %s750 = scalar_lea.vmem [#allocation8], 15
    %p752 = scmp.lt.u32.totalorder 1, 8
    %p753 = pneg %p752
    // Predicated region
    $region460: #{_embed_lookup_padded.1} parent=1 // pred_check
      _
    $region461: #{_embed_lookup_padded.1} parent=1 // pred_check_branch
      %755 = sbr.rel (%p752) target = $region463
    $region462: #{_embed_lookup_padded.1} parent=1 // pred_region
      %s770 = sand.u32 1, 7
      %p771 = scmp.eq.s32.totalorder %s770, 0
      %p772 = pneg %p771
      // Predicated region
      $region475: #{_embed_lookup_padded.1} parent=462 // pred_check
        _
      $region476: #{_embed_lookup_padded.1} parent=462 // pred_check_branch
        %774 = sbr.rel (%p771) target = $region478
      $region477: #{_embed_lookup_padded.1} parent=462 // pred_region
        %s775 = sand.u32 1, 7
        %s776 = ssub.s32 1, %s775
        %s777 = scalar_lea.vmem %s749, %s776 [#allocation5]
        %s778 = ssub.s32 1, %s775
        %s779 = scalar_lea.vmem %s750, %s778 [#allocation8]
        %s780 = sshllo.u32 0, %s775
        loop: start=0, step=1, limit=1
        $region479: #{_embed_lookup_padded.1} parent=477 // loop_pre_header
          _
        $region480: #{_embed_lookup_padded.1} parent=477 // loop_header
          %s782 = sphi 0, %s786
          %p783 = scmp.ge.s32.totalorder %s782, 1
          %s787 = sphi %s777, %s777
          %s788 = sphi %s779, %s779
        $region481: #{_embed_lookup_padded.1} parent=477 // loop_header_branch
          %785 = sbr.rel (%p783) target = $region485
        $region482: #{_embed_lookup_padded.1} parent=477 // loop_body
          %v789 = vld [vmem:[%s787] sm:%s780]
          %790 = vst [vmem:[%s788] sm:%s780] %v789
        $region483: #{_embed_lookup_padded.1} parent=477 // loop_footer
          %s786 = sadd.s32 1, %s782
        $region484: #{_embed_lookup_padded.1} parent=477 // loop_footer_branch
          %781 = sbr.rel target = $region480
        $region485: #{_embed_lookup_padded.1} parent=477 // loop_exit
          _
      $region478: #{_embed_lookup_padded.1} parent=462 // pred_fallthru
        _
    $region463: #{_embed_lookup_padded.1} parent=1 // pred_fallthru
      _
    // Predicated region
    $region464: #{_embed_lookup_padded.1} parent=1 // pred_check
      %p756 = pneg %p752
    $region465: #{_embed_lookup_padded.1} parent=1 // pred_check_branch
      %758 = sbr.rel (%p756) target = $region467
    $region466: #{_embed_lookup_padded.1} parent=1 // pred_region
      %s759 = sshllo.u32 0, 1
      loop: start=0, step=1, limit=1
      $region468: #{_embed_lookup_padded.1} parent=466 // loop_pre_header
        _
      $region469: #{_embed_lookup_padded.1} parent=466 // loop_header
        %s761 = sphi 0, %s765
        %p762 = scmp.ge.s32.totalorder %s761, 1
        %s766 = sphi %s749, %s749
        %s767 = sphi %s750, %s750
      $region470: #{_embed_lookup_padded.1} parent=466 // loop_header_branch
        %764 = sbr.rel (%p762) target = $region474
      $region471: #{_embed_lookup_padded.1} parent=466 // loop_body
        %v768 = vld [vmem:[%s766] sm:%s759]
        %769 = vst [vmem:[%s767] sm:%s759] %v768
      $region472: #{_embed_lookup_padded.1} parent=466 // loop_footer
        %s765 = sadd.s32 1, %s761
      $region473: #{_embed_lookup_padded.1} parent=466 // loop_footer_branch
        %760 = sbr.rel target = $region469
      $region474: #{_embed_lookup_padded.1} parent=466 // loop_exit
        _
    $region467: #{_embed_lookup_padded.1} parent=1 // pred_fallthru
      _
    // Predicated region
    $region486: #{_embed_lookup_padded.1} parent=1 // pred_check
      _
    $region487: #{_embed_lookup_padded.1} parent=1 // pred_check_branch
      %793 = sbr.rel (0) target = $region489
    $region488: #{_embed_lookup_padded.1} parent=1 // pred_region
      %794 = vsyncadd [#allocation2], 16
    $region489: #{_embed_lookup_padded.1} parent=1 // pred_fallthru
      _
    %s795 = smul.u32 16, 1
    %s796 = sshll.u32 %s795, 4
    %797 = dma.done [#allocation2], %s796
    // Predicated region
    $region490: #{_embed_lookup_padded.1} parent=1 // pred_check
      _
    $region491: #{_embed_lookup_padded.1} parent=1 // pred_check_branch
      %799 = sbr.rel (0) target = $region493
    $region492: #{_embed_lookup_padded.1} parent=1 // pred_region
      %s801 = ssub.s32 256, 256
      %802 = vsyncadd [#allocation7], %s801
      %s803 = sshll.u32 [#allocation8], 4
      %s804 = int_to_ptr.vmem [resolvable:$true] %s803
      %809 = dma.vmem_to_hbm [thread:$0]  %s804, 256, %s2, [#allocation7], 128, 128, 8
    $region493: #{_embed_lookup_padded.1} parent=1 // pred_fallthru
      _
    // Predicated region
    $region494: #{_embed_lookup_padded.1} parent=1 // pred_check
      _
    $region495: #{_embed_lookup_padded.1} parent=1 // pred_check_branch
      %811 = sbr.rel (0) target = $region497
    $region496: #{_embed_lookup_padded.1} parent=1 // pred_region
      %812 = dma.done [#allocation7], 256
    $region497: #{_embed_lookup_padded.1} parent=1 // pred_fallthru
      _
    %813 = vsyncpa [#allocation6], 1
    %814 = vsyncpa [#allocation7], 1
  %815 = vsyncmov [#allocation2]
  %s816 = vpop.sfrf %815
  %p817 = scmp.eq.s32.totalorder %s816, 0
  %p818 = pneg %p817
  %820 = shalt.err (%p818)

</llo_original>
